<compile_context>
chip_gen: v7x
topology: tpu7x:2x2x1
jax: 0.10.0
libtpu: 0.0.40
codegen_flags: <defaults>
</compile_context>

<pallas_src>
import jax
import jax.numpy as jnp
from jax import lax
from jax.experimental import pallas as pl
from jax.experimental.pallas import tpu as pltpu


def _round_up(x, m):
    return (x + m - 1) // m * m


def _dot_nt(x, w):
    """x:[M,K] @ w:[N,K]^T -> [M,N], f32 accumulation on the MXU.

    Contracts the last dim of both operands so PyTorch-layout weights
    ([out_features, in_features]) are used directly (no transposes).
    """
    return lax.dot_general(x, w, (((1,), (1,)), ((), ())),
                           preferred_element_type=jnp.float32)


def cbow_kernel(idx_ref,   # VMEM [TM, C]   int32 context indices (batch tile)
                emb_ref,   # VMEM [V, D]    embedding table        (bf16, padded)
                wp_ref,    # VMEM [D, D]    project.weight [out,in](bf16, padded)
                w1_ref,    # VMEM [H, D]    linear1.weight [out,in](bf16, padded)
                b1_ref,    # VMEM [1, H]    linear1.bias           (f32)
                w2_ref,    # VMEM [V, H]    linear2.weight [out,in](bf16, padded)
                b2_ref,    # VMEM [1, V]    linear2.bias (-1e30 in vocab padding)
                out_ref):  # VMEM [TM, V]   log-softmax output     (f32)
    TM, C = idx_ref.shape
    V = emb_ref.shape[0]
    wdt = emb_ref.dtype

    # ---- embedding gather + sum over context as ONE dense MXU matmul --------
    # counts[b, v] = #occurrences of vocab id v in window b, so
    #   sum_c emb[idx[b, c]] == counts @ emb.
    # C is static & tiny -> unrolled full-width VPU compares; out-of-range
    # indices simply match no column (contribute zero), so no OOB reads.
    iota_v = lax.broadcasted_iota(jnp.int32, (TM, V), 1)
    counts = jnp.zeros((TM, V), jnp.float32)
    for c in range(C):
        counts = counts + (iota_v == idx_ref[:, c:c + 1]).astype(jnp.float32)
    summed = jnp.dot(counts.astype(wdt), emb_ref[...],
                     preferred_element_type=jnp.float32)               # [TM, D]

    # ---- shared projection once (sum-then-project by linearity) -------------
    s = _dot_nt(summed.astype(wdt), wp_ref[...])                       # [TM, D]

    # ---- linear1 + relu ------------------------------------------------------
    h1 = jnp.maximum(_dot_nt(s.astype(wdt), w1_ref[...]) + b1_ref[...], 0.0)

    # ---- linear2 -------------------------------------------------------------
    logits = _dot_nt(h1.astype(wdt), w2_ref[...]) + b2_ref[...]        # [TM, V]

    # ---- log_softmax over the vocab (lane) axis ------------------------------
    m = jnp.max(logits, axis=-1, keepdims=True)
    lse = m + jnp.log(jnp.sum(jnp.exp(logits - m), axis=-1, keepdims=True))
    out_ref[...] = logits - lse


def _prepare_params(emb, w_proj, w1, b1, w2, b2, weight_dtype):
    """Pad every feature dim to a 128 multiple and cast weights to weight_dtype.

    Zero padding is exact for the matmuls; padded vocab columns get a -1e30
    bias so they never influence the log-sum-exp.  Biases stay f32.
    """
    n_word, n_dim = emb.shape
    hidden = w1.shape[0]
    V = _round_up(n_word, 128)
    D = _round_up(n_dim, 128)
    H = _round_up(hidden, 128)

    def pad2(a, r, c):
        return jnp.pad(a, ((0, r - a.shape[0]), (0, c - a.shape[1])))

    emb_p = pad2(emb, V, D).astype(weight_dtype)
    wp_p = pad2(w_proj, D, D).astype(weight_dtype)
    w1_p = pad2(w1, H, D).astype(weight_dtype)
    w2_p = pad2(w2, V, H).astype(weight_dtype)
    b1_p = jnp.pad(b1.astype(jnp.float32), (0, H - hidden)).reshape(1, H)
    b2_p = jnp.pad(b2.astype(jnp.float32), (0, V - n_word),
                   constant_values=-1e30).reshape(1, V)
    return emb_p, wp_p, w1_p, b1_p, w2_p, b2_p


def cbow_forward(idx, emb, w_proj, w1, b1, w2, b2, *, block_m=128,
                 weight_dtype=jnp.bfloat16):
    """Pallas CBOW forward.

    idx: int32 [C] (single context window, original PyTorch semantics ->
         [1, n_word]) or [B, C] (batch of context windows -> [B, n_word]).
    Weights keep PyTorch [out_features, in_features] layout.
    """
    idx2 = idx[None, :] if idx.ndim == 1 else idx
    B, C = idx2.shape
    n_word, _ = emb.shape

    emb_p, wp_p, w1_p, b1_p, w2_p, b2_p = _prepare_params(
        emb, w_proj, w1, b1, w2, b2, weight_dtype)
    V, D = emb_p.shape
    H = w1_p.shape[0]

    # Batch tile: fill the MXU's 128 rows per step; pad B up to a TM multiple.
    TM = min(block_m, _round_up(B, 8))
    B_pad = _round_up(B, TM)
    idx_p = jnp.pad(idx2.astype(jnp.int32), ((0, B_pad - B), (0, 0)))
    nb = B_pad // TM

    flops = 2 * B_pad * (V * D + D * D + D * H + H * V)
    bytes_accessed = (emb_p.nbytes + wp_p.nbytes + w1_p.nbytes + b1_p.nbytes
                      + w2_p.nbytes + b2_p.nbytes          # full weight DMA
                      + idx_p.nbytes + B_pad * V * 4)      # indices + output

    # VMEM budget: resident whole weights + double-buffered idx/out tiles
    # + rough intermediate (counts / logits / activations) slack.
    resident = (emb_p.nbytes + wp_p.nbytes + w1_p.nbytes + b1_p.nbytes
                + w2_p.nbytes + b2_p.nbytes
                + 2 * (TM * C * 4 + TM * V * 4)
                + 4 * TM * V * 4 + 2 * TM * (D + H) * 4)
    vmem_limit = int(min(max(2 * resident, 32 * 1024 * 1024),
                         64 * 1024 * 1024))   # stay under v7x's 64 MiB

    out = pl.pallas_call(
        cbow_kernel,
        out_shape=jax.ShapeDtypeStruct((B_pad, V), jnp.float32),
        grid=(nb,),
        in_specs=[
            pl.BlockSpec((TM, C), lambda i: (i, 0)),                # idx tile (pipelined)
            pl.BlockSpec(memory_space=pltpu.MemorySpace.VMEM),      # embedding (resident)
            pl.BlockSpec(memory_space=pltpu.MemorySpace.VMEM),      # W_proj
            pl.BlockSpec(memory_space=pltpu.MemorySpace.VMEM),      # W1
            pl.BlockSpec(memory_space=pltpu.MemorySpace.VMEM),      # b1
            pl.BlockSpec(memory_space=pltpu.MemorySpace.VMEM),      # W2
            pl.BlockSpec(memory_space=pltpu.MemorySpace.VMEM),      # b2
        ],
        out_specs=pl.BlockSpec((TM, V), lambda i: (i, 0)),
        compiler_params=pltpu.CompilerParams(
            dimension_semantics=("parallel",),      # shard batch tiles on v7x
            vmem_limit_bytes=vmem_limit),
        cost_estimate=pl.CostEstimate(
            flops=flops,
            transcendentals=B_pad * V + B_pad,
            bytes_accessed=bytes_accessed),
    )(idx_p, emb_p, wp_p, w1_p, b1_p, w2_p, b2_p)

    return out[:B, :n_word]


def cbow_reference(idx2, emb_p, wp_p, w1_p, b1_p, w2_p, b2_p):
    """Pure-JAX reference mirroring the kernel's dtype pipeline exactly."""
    wdt = emb_p.dtype
    e = emb_p[idx2].astype(jnp.float32)                  # embedding lookup [B,C,D]
    s = jnp.sum(e, axis=1)                               # sum over context words
    s = _dot_nt(s.astype(wdt), wp_p)                     # shared projection
    h = jnp.maximum(_dot_nt(s.astype(wdt), w1_p) + b1_p, 0.0)   # linear1 + relu
    logits = _dot_nt(h.astype(wdt), w2_p) + b2_p                 # linear2
    return jax.nn.log_softmax(logits, axis=-1)


if __name__ == "__main__":
    # Small CBOW-consistent shapes.  B=256 so each grid step is a full
    # 128-row MXU tile (grid of 2 batch tiles); vocab=256 (2 lane tiles),
    # embed dim=32 (padded to 128 in the wrapper), hidden=128, context
    # window C = 2*context_size = 4.
    n_word, n_dim, hidden, context_size = 256, 32, 128, 2
    C = 2 * context_size
    B = 256

    key = jax.random.PRNGKey(0)
    k = jax.random.split(key, 7)
    emb    = jax.random.normal(k[0], (n_word, n_dim),  jnp.float32)
    w_proj = jax.random.normal(k[1], (n_dim, n_dim),   jnp.float32) * 0.1
    w1     = jax.random.normal(k[2], (hidden, n_dim),  jnp.float32) * 0.1
    b1     = jax.random.normal(k[3], (hidden,),        jnp.float32) * 0.1
    w2     = jax.random.normal(k[4], (n_word, hidden), jnp.float32) * 0.1
    b2     = jax.random.normal(k[5], (n_word,),        jnp.float32) * 0.1
    idx    = jax.random.randint(k[6], (B, C), 0, n_word, dtype=jnp.int32)

    # Batched forward (two 128-row grid steps).
    out = jax.block_until_ready(cbow_forward(idx, emb, w_proj, w1, b1, w2, b2))

    # Reference uses the exact same padded / bf16-cast parameters.
    params = _prepare_params(emb, w_proj, w1, b1, w2, b2, jnp.bfloat16)
    ref = cbow_reference(idx, *params)[:B, :n_word]
    assert out.shape == (B, n_word), out.shape
    assert out.dtype == jnp.float32
    err = float(jnp.max(jnp.abs(out - ref)))
    assert err < 2e-3, f"max abs err {err}"

    # Single-example path (original module semantics: [C] -> [1, n_word]).
    out1 = jax.block_until_ready(
        cbow_forward(idx[0], emb, w_proj, w1, b1, w2, b2))
    assert out1.shape == (1, n_word), out1.shape
    err1 = float(jnp.max(jnp.abs(out1 - ref[0:1])))
    assert err1 < 2e-3, f"max abs err {err1}"

    print("KERNEL_OK")
</pallas_src>

<mosaic_0001>
module attributes {stable_mosaic.version = 11 : i64} {
  func.func @cbow_kernel(%arg0: i32, %arg1: memref<128x4xi32, #tpu.memory_space<vmem>>, %arg2: memref<256x128xbf16, #tpu.memory_space<vmem>>, %arg3: memref<128x128xbf16, #tpu.memory_space<vmem>>, %arg4: memref<128x128xbf16, #tpu.memory_space<vmem>>, %arg5: memref<1x128xf32, #tpu.memory_space<vmem>>, %arg6: memref<256x128xbf16, #tpu.memory_space<vmem>>, %arg7: memref<1x256xf32, #tpu.memory_space<vmem>>, %arg8: memref<128x256xf32, #tpu.memory_space<vmem>>) attributes {dimension_semantics = [#tpu.dimension_semantics<parallel>], iteration_bounds = array<i64: 2>, scalar_prefetch = 0 : i64, scratch_operands = 0 : i64, tpu.core_type = #tpu.core_type<tc>, window_params = [{transform_indices = @transform_0, window_bounds = array<i64: 128, 4>}, {pipeline_mode = #tpu.pipeline_mode<synchronous>, transform_indices = @transform_1, window_bounds = array<i64: 256, 128>}, {pipeline_mode = #tpu.pipeline_mode<synchronous>, transform_indices = @transform_2, window_bounds = array<i64: 128, 128>}, {pipeline_mode = #tpu.pipeline_mode<synchronous>, transform_indices = @transform_3, window_bounds = array<i64: 128, 128>}, {pipeline_mode = #tpu.pipeline_mode<synchronous>, transform_indices = @transform_4, window_bounds = array<i64: 1, 128>}, {pipeline_mode = #tpu.pipeline_mode<synchronous>, transform_indices = @transform_5, window_bounds = array<i64: 256, 128>}, {pipeline_mode = #tpu.pipeline_mode<synchronous>, transform_indices = @transform_6, window_bounds = array<i64: 1, 256>}, {transform_indices = @transform_7, window_bounds = array<i64: 128, 256>}]} {
    %0 = tpu.iota {dimensions = array<i32: 1>} : vector<128x256xi32>
    %cst = arith.constant 0.000000e+00 : f32
    %1 = vector.broadcast %cst : f32 to vector<128x256xf32>
    %c0 = arith.constant 0 : index
    %c0_0 = arith.constant 0 : index
    %2 = vector.load %arg1[%c0, %c0_0] : memref<128x4xi32, #tpu.memory_space<vmem>>, vector<128x1xi32>
    %3 = vector.broadcast %2 : vector<128x1xi32> to vector<128x256xi32>
    %4 = arith.cmpi eq, %0, %3 : vector<128x256xi32>
    %5 = arith.extui %4 : vector<128x256xi1> to vector<128x256xi32>
    %6 = arith.sitofp %5 : vector<128x256xi32> to vector<128x256xf32>
    %7 = arith.addf %1, %6 : vector<128x256xf32>
    %c0_1 = arith.constant 0 : index
    %c1 = arith.constant 1 : index
    %8 = vector.load %arg1[%c0_1, %c1] : memref<128x4xi32, #tpu.memory_space<vmem>>, vector<128x1xi32>
    %9 = vector.broadcast %8 : vector<128x1xi32> to vector<128x256xi32>
    %10 = arith.cmpi eq, %0, %9 : vector<128x256xi32>
    %11 = arith.extui %10 : vector<128x256xi1> to vector<128x256xi32>
    %12 = arith.sitofp %11 : vector<128x256xi32> to vector<128x256xf32>
    %13 = arith.addf %7, %12 : vector<128x256xf32>
    %c0_2 = arith.constant 0 : index
    %c2 = arith.constant 2 : index
    %14 = vector.load %arg1[%c0_2, %c2] : memref<128x4xi32, #tpu.memory_space<vmem>>, vector<128x1xi32>
    %15 = vector.broadcast %14 : vector<128x1xi32> to vector<128x256xi32>
    %16 = arith.cmpi eq, %0, %15 : vector<128x256xi32>
    %17 = arith.extui %16 : vector<128x256xi1> to vector<128x256xi32>
    %18 = arith.sitofp %17 : vector<128x256xi32> to vector<128x256xf32>
    %19 = arith.addf %13, %18 : vector<128x256xf32>
    %c0_3 = arith.constant 0 : index
    %c3 = arith.constant 3 : index
    %20 = vector.load %arg1[%c0_3, %c3] : memref<128x4xi32, #tpu.memory_space<vmem>>, vector<128x1xi32>
    %21 = vector.broadcast %20 : vector<128x1xi32> to vector<128x256xi32>
    %22 = arith.cmpi eq, %0, %21 : vector<128x256xi32>
    %23 = arith.extui %22 : vector<128x256xi1> to vector<128x256xi32>
    %24 = arith.sitofp %23 : vector<128x256xi32> to vector<128x256xf32>
    %25 = arith.addf %19, %24 : vector<128x256xf32>
    %26 = arith.truncf %25 : vector<128x256xf32> to vector<128x256xbf16>
    %c0_4 = arith.constant 0 : index
    %c0_5 = arith.constant 0 : index
    %27 = vector.load %arg2[%c0_4, %c0_5] : memref<256x128xbf16, #tpu.memory_space<vmem>>, vector<256x128xbf16>
    %cst_6 = arith.constant dense<0.000000e+00> : vector<128x128xf32>
    %28 = tpu.matmul %26, %27, %cst_6 {dimension_numbers = #tpu.dot_dimension_numbers<[1], [0], [0], [1], [0, 0, 1, 1], [], []>} : vector<128x256xbf16>, vector<256x128xbf16>, vector<128x128xf32> -> vector<128x128xf32>
    %29 = arith.truncf %28 : vector<128x128xf32> to vector<128x128xbf16>
    %c0_7 = arith.constant 0 : index
    %c0_8 = arith.constant 0 : index
    %30 = vector.load %arg3[%c0_7, %c0_8] : memref<128x128xbf16, #tpu.memory_space<vmem>>, vector<128x128xbf16>
    %cst_9 = arith.constant dense<0.000000e+00> : vector<128x128xf32>
    %31 = tpu.matmul %29, %30, %cst_9 {dimension_numbers = #tpu.dot_dimension_numbers<[1], [1], [0], [0], [0, 0, 1, 0], [], []>} : vector<128x128xbf16>, vector<128x128xbf16>, vector<128x128xf32> -> vector<128x128xf32>
    %32 = arith.truncf %31 : vector<128x128xf32> to vector<128x128xbf16>
    %c0_10 = arith.constant 0 : index
    %c0_11 = arith.constant 0 : index
    %33 = vector.load %arg4[%c0_10, %c0_11] : memref<128x128xbf16, #tpu.memory_space<vmem>>, vector<128x128xbf16>
    %cst_12 = arith.constant dense<0.000000e+00> : vector<128x128xf32>
    %34 = tpu.matmul %32, %33, %cst_12 {dimension_numbers = #tpu.dot_dimension_numbers<[1], [1], [0], [0], [0, 0, 1, 0], [], []>} : vector<128x128xbf16>, vector<128x128xbf16>, vector<128x128xf32> -> vector<128x128xf32>
    %c0_13 = arith.constant 0 : index
    %c0_14 = arith.constant 0 : index
    %35 = vector.load %arg5[%c0_13, %c0_14] : memref<1x128xf32, #tpu.memory_space<vmem>>, vector<1x128xf32>
    %36 = vector.broadcast %35 : vector<1x128xf32> to vector<128x128xf32>
    %37 = arith.addf %34, %36 : vector<128x128xf32>
    %cst_15 = arith.constant 0.000000e+00 : f32
    %38 = vector.broadcast %cst_15 : f32 to vector<128x128xf32>
    %39 = arith.maximumf %37, %38 : vector<128x128xf32>
    %40 = arith.truncf %39 : vector<128x128xf32> to vector<128x128xbf16>
    %c0_16 = arith.constant 0 : index
    %c0_17 = arith.constant 0 : index
    %41 = vector.load %arg6[%c0_16, %c0_17] : memref<256x128xbf16, #tpu.memory_space<vmem>>, vector<256x128xbf16>
    %cst_18 = arith.constant dense<0.000000e+00> : vector<128x256xf32>
    %42 = tpu.matmul %40, %41, %cst_18 {dimension_numbers = #tpu.dot_dimension_numbers<[1], [1], [0], [0], [0, 0, 1, 0], [], []>} : vector<128x128xbf16>, vector<256x128xbf16>, vector<128x256xf32> -> vector<128x256xf32>
    %c0_19 = arith.constant 0 : index
    %c0_20 = arith.constant 0 : index
    %43 = vector.load %arg7[%c0_19, %c0_20] : memref<1x256xf32, #tpu.memory_space<vmem>>, vector<1x256xf32>
    %44 = vector.broadcast %43 : vector<1x256xf32> to vector<128x256xf32>
    %45 = arith.addf %42, %44 : vector<128x256xf32>
    %cst_21 = arith.constant dense<0xFF800000> : vector<128xf32>
    %46 = vector.multi_reduction <maximumf>, %45, %cst_21 [1] : vector<128x256xf32> to vector<128xf32>
    %47 = vector.shape_cast %46 : vector<128xf32> to vector<128x1xf32>
    %48 = vector.broadcast %47 : vector<128x1xf32> to vector<128x256xf32>
    %49 = arith.subf %45, %48 : vector<128x256xf32>
    %50 = math.exp %49 : vector<128x256xf32>
    %cst_22 = arith.constant dense<0.000000e+00> : vector<128xf32>
    %51 = vector.multi_reduction <add>, %50, %cst_22 [1] : vector<128x256xf32> to vector<128xf32>
    %52 = vector.shape_cast %51 : vector<128xf32> to vector<128x1xf32>
    %53 = math.log %52 : vector<128x1xf32>
    %54 = arith.addf %47, %53 : vector<128x1xf32>
    %55 = vector.broadcast %54 : vector<128x1xf32> to vector<128x256xf32>
    %56 = arith.subf %45, %55 : vector<128x256xf32>
    %c0_23 = arith.constant 0 : index
    %c0_24 = arith.constant 0 : index
    %57 = vector.load %arg8[%c0_23, %c0_24] : memref<128x256xf32, #tpu.memory_space<vmem>>, vector<128x256xf32>
    tpu.vector_store %arg8[%c0_23, %c0_24], %56 {strides = array<i32>} : memref<128x256xf32, #tpu.memory_space<vmem>>, vector<128x256xf32>,
    return
  }
  func.func @transform_0(%arg0: i32) -> (i32, i32) {
    %c0_i32 = arith.constant 0 : i32
    %c0_i32_0 = arith.constant 0 : i32
    return %arg0, %c0_i32 : i32, i32
  }
  func.func @transform_1(%arg0: i32) -> (i32, i32) {
    %c0_i32 = arith.constant 0 : i32
    %c0_i32_0 = arith.constant 0 : i32
    %c0_i32_1 = arith.constant 0 : i32
    return %c0_i32, %c0_i32_0 : i32, i32
  }
  func.func @transform_2(%arg0: i32) -> (i32, i32) {
    %c0_i32 = arith.constant 0 : i32
    %c0_i32_0 = arith.constant 0 : i32
    %c0_i32_1 = arith.constant 0 : i32
    return %c0_i32, %c0_i32_0 : i32, i32
  }
  func.func @transform_3(%arg0: i32) -> (i32, i32) {
    %c0_i32 = arith.constant 0 : i32
    %c0_i32_0 = arith.constant 0 : i32
    %c0_i32_1 = arith.constant 0 : i32
    return %c0_i32, %c0_i32_0 : i32, i32
  }
  func.func @transform_4(%arg0: i32) -> (i32, i32) {
    %c0_i32 = arith.constant 0 : i32
    %c0_i32_0 = arith.constant 0 : i32
    %c0_i32_1 = arith.constant 0 : i32
    return %c0_i32, %c0_i32_0 : i32, i32
  }
  func.func @transform_5(%arg0: i32) -> (i32, i32) {
    %c0_i32 = arith.constant 0 : i32
    %c0_i32_0 = arith.constant 0 : i32
    %c0_i32_1 = arith.constant 0 : i32
    return %c0_i32, %c0_i32_0 : i32, i32
  }
  func.func @transform_6(%arg0: i32) -> (i32, i32) {
    %c0_i32 = arith.constant 0 : i32
    %c0_i32_0 = arith.constant 0 : i32
    %c0_i32_1 = arith.constant 0 : i32
    return %c0_i32, %c0_i32_0 : i32, i32
  }
  func.func @transform_7(%arg0: i32) -> (i32, i32) {
    %c0_i32 = arith.constant 0 : i32
    %c0_i32_0 = arith.constant 0 : i32
    return %arg0, %c0_i32 : i32, i32
  }
}

</mosaic_0001>

<llo_original>
// kernel: tpu_custom_call.1
$region0: #{tpu_custom_call.1}
  #allocation0 [shape = 'u32[]', space=smem, size = 0x4, offset = 0x4, fixed_abs, tag = 'smem constant byte address 0x4 - core index']
  #allocation1 [shape = 'u32[144,128]{1,0:T(1,128)}', space=vmem, size = 0x12000, scoped, tag = 'internal scratch']
  %s0 = inlined_call_operand.vmem [shape: s32[256,4], index: 0, kind: input, shape index: {}]
  %s1 = inlined_call_operand.vmem [shape: bf16[256,128], index: 1, kind: input, shape index: {}]
  %s2 = inlined_call_operand.hbm [shape: bf16[128,128], index: 2, kind: input, shape index: {}]
  %s3 = inlined_call_operand.hbm [shape: bf16[128,128], index: 3, kind: input, shape index: {}]
  %s4 = inlined_call_operand.vmem [shape: f32[1,128], index: 4, kind: input, shape index: {}]
  %s5 = inlined_call_operand.vmem [shape: bf16[256,128], index: 5, kind: input, shape index: {}]
  %s6 = inlined_call_operand.vmem [shape: f32[1,256], index: 6, kind: input, shape index: {}]
  %s7 = inlined_call_operand.hbm [shape: f32[256,256], index: 7, kind: output, shape index: {}]
  %s8 = sld [smem:[#allocation0]]
  $region69: #{tpu_custom_call.1} parent=0
    _
  %s10 = ssub.s32 1, %s8
  %s11 = scalar_select 0, %s10, %s8
  $region1: #{tpu_custom_call.1} parent=0
    #allocation2 [shape = 'u8[32768]{0}', space=vmem, size = 0x8000, scoped, tag = 'input window, operand 2, single buffered']
    #allocation3 [shape = 's32[2]{0}', space=sflag, size = 0x8, scoped, tag = 'scoped memory for tpu_custom_call.1']
    #allocation4 [shape = 's32[2]{0}', space=sflag, size = 0x8, scoped, tag = 'scoped memory for tpu_custom_call.1']
    #allocation5 [shape = 'u8[32768]{0}', space=vmem, size = 0x8000, scoped, tag = 'input window, operand 3, single buffered']
    #allocation6 [shape = 's32[1]{0}', space=sflag, size = 0x4, scoped, tag = 'scoped memory for tpu_custom_call.1']
    #allocation7 [shape = 'u8[262144]{0}', space=vmem, size = 0x40000, scoped, tag = 'output window, operand 0']
    %12 = vsyncpa [#allocation3], 0
    %13 = vsyncpa [#allocation6], 0
    %14 = vsyncpa [#allocation4], 0
    %s15 = scalar_lea.sflag [#allocation4], 1
    %16 = vsyncpa %s15, 0
    loop: start=0, step=1, limit=4
    $region2: #{tpu_custom_call.1} parent=1 // loop_pre_header
      _
    $region3: #{tpu_custom_call.1} parent=1 // loop_header
      %s18 = sphi 0, %s22
      %p19 = scmp.ge.s32.totalorder %s18, 4
      %s28 = sphi 0, %s30
      %s31 = sphi 0, %s28
      %s32 = sphi 0, %s31
      %s48 = sphi 0, %s32
      %s52 = sphi 0, %s52
      %s54 = sphi 0, %s52
      %s55 = sphi 0, %s54
      %s69 = sphi 0, %s55
      %s73 = sphi 0, %s73
      %s75 = sphi 0, %s73
      %s76 = sphi 0, %s75
      %s90 = sphi 0, %s76
      %s94 = sphi 0, %s94
      %s96 = sphi 0, %s94
      %s97 = sphi 0, %s96
      %s111 = sphi 0, %s97
      %s115 = sphi 0, %s115
      %s117 = sphi 0, %s115
      %s118 = sphi 0, %s117
      %s132 = sphi 0, %s118
      %s136 = sphi 0, %s136
      %s138 = sphi 0, %s136
      %s139 = sphi 0, %s138
      %s153 = sphi 0, %s139
      %s157 = sphi 0, %s157
      %s159 = sphi 0, %s157
      %s160 = sphi 0, %s159
      %s174 = sphi 0, %s160
      %s180 = sphi 0, %s182
      %s183 = sphi 0, %s180
      %s184 = sphi 0, %s183
      %s200 = sphi 0, %s184
    $region4: #{tpu_custom_call.1} parent=1 // loop_header_branch
      %21 = sbr.rel (%p19) target = $region8
    $region5: #{tpu_custom_call.1} parent=1 // loop_body
      %s23 = ssub.s32 %s18, 1
      %s24 = ssub.s32 %s18, 2
      %s25 = sadd.s32 %s18, 1
      %s26 = ssub.s32 %s18, %s25
      %p27 = scmp.eq.s32.totalorder %s26, 0
      %s29 = sadd.s32 %s28, 1
      %s30 = scalar_select %p27, %s28, %s29
      %p33 = pneg %p27
      %p34 = scmp.eq.s32.totalorder %s18, 1
      %p35 = por %p33, %p34
      %p36 = scmp.ne.s32.totalorder %s28, %s31
      %p37 = scmp.eq.s32.totalorder %s18, 0
      %p38 = por %p36, %p37
      %p39 = scmp.ne.s32.totalorder %s28, %s31
      %p40 = scmp.eq.s32.totalorder %s23, 1
      %p41 = por %p39, %p40
      %p42 = scmp.ne.s32.totalorder %s31, %s32
      %p43 = scmp.eq.s32.totalorder %s23, 0
      %p44 = por %p42, %p43
      %p45 = scmp.ne.s32.totalorder %s31, %s32
      %p46 = scmp.eq.s32.totalorder %s24, 1
      %p47 = por %p45, %p46
      %p49 = scmp.ne.s32.totalorder %s32, %s48
      %p50 = scmp.eq.s32.totalorder %s24, 0
      %p51 = por %p49, %p50
      %s53 = sadd.s32 %s52, 1
      %p56 = scmp.eq.s32.totalorder %s18, 1
      %p57 = scmp.ne.s32.totalorder %s52, %s54
      %p58 = scmp.eq.s32.totalorder %s18, 0
      %p59 = por %p57, %p58
      %p60 = scmp.ne.s32.totalorder %s52, %s54
      %p61 = scmp.eq.s32.totalorder %s23, 1
      %p62 = por %p60, %p61
      %p63 = scmp.ne.s32.totalorder %s54, %s55
      %p64 = scmp.eq.s32.totalorder %s23, 0
      %p65 = por %p63, %p64
      %p66 = scmp.ne.s32.totalorder %s54, %s55
      %p67 = scmp.eq.s32.totalorder %s24, 1
      %p68 = por %p66, %p67
      %p70 = scmp.ne.s32.totalorder %s55, %s69
      %p71 = scmp.eq.s32.totalorder %s24, 0
      %p72 = por %p70, %p71
      %s74 = sadd.s32 %s73, 1
      %p77 = scmp.eq.s32.totalorder %s18, 1
      %p78 = scmp.ne.s32.totalorder %s73, %s75
      %p79 = scmp.eq.s32.totalorder %s18, 0
      %p80 = por %p78, %p79
      %p81 = scmp.ne.s32.totalorder %s73, %s75
      %p82 = scmp.eq.s32.totalorder %s23, 1
      %p83 = por %p81, %p82
      %p84 = scmp.ne.s32.totalorder %s75, %s76
      %p85 = scmp.eq.s32.totalorder %s23, 0
      %p86 = por %p84, %p85
      %p87 = scmp.ne.s32.totalorder %s75, %s76
      %p88 = scmp.eq.s32.totalorder %s24, 1
      %p89 = por %p87, %p88
      %p91 = scmp.ne.s32.totalorder %s76, %s90
      %p92 = scmp.eq.s32.totalorder %s24, 0
      %p93 = por %p91, %p92
      %s95 = sadd.s32 %s94, 1
      %p98 = scmp.eq.s32.totalorder %s18, 1
      %p99 = scmp.ne.s32.totalorder %s94, %s96
      %p100 = scmp.eq.s32.totalorder %s18, 0
      %p101 = por %p99, %p100
      %p102 = scmp.ne.s32.totalorder %s94, %s96
      %p103 = scmp.eq.s32.totalorder %s23, 1
      %p104 = por %p102, %p103
      %p105 = scmp.ne.s32.totalorder %s96, %s97
      %p106 = scmp.eq.s32.totalorder %s23, 0
      %p107 = por %p105, %p106
      %p108 = scmp.ne.s32.totalorder %s96, %s97
      %p109 = scmp.eq.s32.totalorder %s24, 1
      %p110 = por %p108, %p109
      %p112 = scmp.ne.s32.totalorder %s97, %s111
      %p113 = scmp.eq.s32.totalorder %s24, 0
      %p114 = por %p112, %p113
      %s116 = sadd.s32 %s115, 1
      %p119 = scmp.eq.s32.totalorder %s18, 1
      %p120 = scmp.ne.s32.totalorder %s115, %s117
      %p121 = scmp.eq.s32.totalorder %s18, 0
      %p122 = por %p120, %p121
      %p123 = scmp.ne.s32.totalorder %s115, %s117
      %p124 = scmp.eq.s32.totalorder %s23, 1
      %p125 = por %p123, %p124
      %p126 = scmp.ne.s32.totalorder %s117, %s118
      %p127 = scmp.eq.s32.totalorder %s23, 0
      %p128 = por %p126, %p127
      %p129 = scmp.ne.s32.totalorder %s117, %s118
      %p130 = scmp.eq.s32.totalorder %s24, 1
      %p131 = por %p129, %p130
      %p133 = scmp.ne.s32.totalorder %s118, %s132
      %p134 = scmp.eq.s32.totalorder %s24, 0
      %p135 = por %p133, %p134
      %s137 = sadd.s32 %s136, 1
      %p140 = scmp.eq.s32.totalorder %s18, 1
      %p141 = scmp.ne.s32.totalorder %s136, %s138
      %p142 = scmp.eq.s32.totalorder %s18, 0
      %p143 = por %p141, %p142
      %p144 = scmp.ne.s32.totalorder %s136, %s138
      %p145 = scmp.eq.s32.totalorder %s23, 1
      %p146 = por %p144, %p145
      %p147 = scmp.ne.s32.totalorder %s138, %s139
      %p148 = scmp.eq.s32.totalorder %s23, 0
      %p149 = por %p147, %p148
      %p150 = scmp.ne.s32.totalorder %s138, %s139
      %p151 = scmp.eq.s32.totalorder %s24, 1
      %p152 = por %p150, %p151
      %p154 = scmp.ne.s32.totalorder %s139, %s153
      %p155 = scmp.eq.s32.totalorder %s24, 0
      %p156 = por %p154, %p155
      %s158 = sadd.s32 %s157, 1
      %p161 = scmp.eq.s32.totalorder %s18, 1
      %p162 = scmp.ne.s32.totalorder %s157, %s159
      %p163 = scmp.eq.s32.totalorder %s18, 0
      %p164 = por %p162, %p163
      %p165 = scmp.ne.s32.totalorder %s157, %s159
      %p166 = scmp.eq.s32.totalorder %s23, 1
      %p167 = por %p165, %p166
      %p168 = scmp.ne.s32.totalorder %s159, %s160
      %p169 = scmp.eq.s32.totalorder %s23, 0
      %p170 = por %p168, %p169
      %p171 = scmp.ne.s32.totalorder %s159, %s160
      %p172 = scmp.eq.s32.totalorder %s24, 1
      %p173 = por %p171, %p172
      %p175 = scmp.ne.s32.totalorder %s160, %s174
      %p176 = scmp.eq.s32.totalorder %s24, 0
      %p177 = por %p175, %p176
      %s178 = ssub.s32 %s18, %s25
      %p179 = scmp.eq.s32.totalorder %s178, 0
      %s181 = sadd.s32 %s180, 1
      %s182 = scalar_select %p179, %s180, %s181
      %p185 = pneg %p179
      %p186 = scmp.eq.s32.totalorder %s18, 1
      %p187 = por %p185, %p186
      %p188 = scmp.ne.s32.totalorder %s180, %s183
      %p189 = scmp.eq.s32.totalorder %s18, 0
      %p190 = por %p188, %p189
      %p191 = scmp.ne.s32.totalorder %s180, %s183
      %p192 = scmp.eq.s32.totalorder %s23, 1
      %p193 = por %p191, %p192
      %p194 = scmp.ne.s32.totalorder %s183, %s184
      %p195 = scmp.eq.s32.totalorder %s23, 0
      %p196 = por %p194, %p195
      %p197 = scmp.ne.s32.totalorder %s183, %s184
      %p198 = scmp.eq.s32.totalorder %s24, 1
      %p199 = por %p197, %p198
      %p201 = scmp.ne.s32.totalorder %s184, %s200
      %p202 = scmp.eq.s32.totalorder %s24, 0
      %p203 = por %p201, %p202
      %p204 = scmp.le.s32.totalorder 1, %s18
      %p205 = scmp.lt.s32.totalorder %s18, 3
      %p206 = pnand %p204, %p205
      %p207 = pneg %p206
      // Predicated region
      $region9: #{tpu_custom_call.1} parent=5 // pred_check
        _
      $region10: #{tpu_custom_call.1} parent=5 // pred_check_branch
        %209 = sbr.rel (%p206) target = $region12
      $region11: #{tpu_custom_call.1} parent=5 // pred_region
        %s210 = ssub.s32 %s18, 1
        // Predicated region
        $region13: #{tpu_custom_call.1} parent=11 // pred_check
          %p211 = pneg %p65
        $region14: #{tpu_custom_call.1} parent=11 // pred_check_branch
          %213 = sbr.rel (%p211) target = $region16
        $region15: #{tpu_custom_call.1} parent=11 // pred_region
          _
        $region16: #{tpu_custom_call.1} parent=11 // pred_fallthru
          _
        // Predicated region
        $region17: #{tpu_custom_call.1} parent=11 // pred_check
          %p214 = pneg %p86
        $region18: #{tpu_custom_call.1} parent=11 // pred_check_branch
          %216 = sbr.rel (%p214) target = $region20
        $region19: #{tpu_custom_call.1} parent=11 // pred_region
          %s218 = ssub.s32 1024, 1024
          %219 = vsyncadd [#allocation3], %s218
          %s220 = sshll.u32 [#allocation2], 4
          %s221 = int_to_ptr.vmem [resolvable:$true] %s220
          %226 = dma.hbm_to_vmem [thread:$0]  %s2, 1024, %s221, [#allocation3], 64, 64, 4
        $region20: #{tpu_custom_call.1} parent=11 // pred_fallthru
          _
        // Predicated region
        $region21: #{tpu_custom_call.1} parent=11 // pred_check
          %p227 = pneg %p107
        $region22: #{tpu_custom_call.1} parent=11 // pred_check_branch
          %229 = sbr.rel (%p227) target = $region24
        $region23: #{tpu_custom_call.1} parent=11 // pred_region
          %s231 = ssub.s32 1024, 1024
          %232 = vsyncadd [#allocation6], %s231
          %s233 = sshll.u32 [#allocation5], 4
          %s234 = int_to_ptr.vmem [resolvable:$true] %s233
          %239 = dma.hbm_to_vmem [thread:$0]  %s3, 1024, %s234, [#allocation6], 64, 64, 4
        $region24: #{tpu_custom_call.1} parent=11 // pred_fallthru
          _
        // Predicated region
        $region25: #{tpu_custom_call.1} parent=11 // pred_check
          %p240 = pneg %p128
        $region26: #{tpu_custom_call.1} parent=11 // pred_check_branch
          %242 = sbr.rel (%p240) target = $region28
        $region27: #{tpu_custom_call.1} parent=11 // pred_region
          _
        $region28: #{tpu_custom_call.1} parent=11 // pred_fallthru
          _
        // Predicated region
        $region29: #{tpu_custom_call.1} parent=11 // pred_check
          %p243 = pneg %p149
        $region30: #{tpu_custom_call.1} parent=11 // pred_check_branch
          %245 = sbr.rel (%p243) target = $region32
        $region31: #{tpu_custom_call.1} parent=11 // pred_region
          _
        $region32: #{tpu_custom_call.1} parent=11 // pred_fallthru
          _
        // Predicated region
        $region33: #{tpu_custom_call.1} parent=11 // pred_check
          %p246 = pneg %p170
        $region34: #{tpu_custom_call.1} parent=11 // pred_check_branch
          %248 = sbr.rel (%p246) target = $region36
        $region35: #{tpu_custom_call.1} parent=11 // pred_region
          _
        $region36: #{tpu_custom_call.1} parent=11 // pred_fallthru
          _
      $region12: #{tpu_custom_call.1} parent=5 // pred_fallthru
        _
      %p249 = scmp.lt.s32.totalorder %s18, 2
      // Predicated region
      $region37: #{tpu_custom_call.1} parent=5 // pred_check
        %p250 = pneg %p249
      $region38: #{tpu_custom_call.1} parent=5 // pred_check_branch
        %252 = sbr.rel (%p250) target = $region40
      $region39: #{tpu_custom_call.1} parent=5 // pred_region
        // Predicated region
        $region41: #{tpu_custom_call.1} parent=39 // pred_check
          %p253 = pneg %p38
        $region42: #{tpu_custom_call.1} parent=39 // pred_check_branch
          %255 = sbr.rel (%p253) target = $region44
        $region43: #{tpu_custom_call.1} parent=39 // pred_region
          %s256 = smul.u32 16, %s18
          %p257 = scmp.lt.s32.totalorder %s256, 31
          %s258 = scalar_select %p257, %s256, 31
          %s259 = smul.addr %s258, 8
          %s260 = scalar_lea.vmem %s0, %s259
          %s261 = smul.u32 16, %s18
        $region44: #{tpu_custom_call.1} parent=39 // pred_fallthru
          _
      $region40: #{tpu_custom_call.1} parent=5 // pred_fallthru
        _
      %p262 = scmp.le.s32.totalorder 1, %s18
      %p263 = scmp.lt.s32.totalorder %s18, 3
      %p264 = pnand %p262, %p263
      %p265 = pneg %p264
      // Predicated region
      $region45: #{tpu_custom_call.1} parent=5 // pred_check
        _
      $region46: #{tpu_custom_call.1} parent=5 // pred_check_branch
        %267 = sbr.rel (%p264) target = $region48
      $region47: #{tpu_custom_call.1} parent=5 // pred_region
        %s268 = ssub.s32 %s18, 1
        // Predicated region
        $region49: #{tpu_custom_call.1} parent=47 // pred_check
          %p269 = pneg %p86
        $region50: #{tpu_custom_call.1} parent=47 // pred_check_branch
          %271 = sbr.rel (%p269) target = $region52
        $region51: #{tpu_custom_call.1} parent=47 // pred_region
          %272 = dma.done [#allocation3], 1024
        $region52: #{tpu_custom_call.1} parent=47 // pred_fallthru
          _
        // Predicated region
        $region53: #{tpu_custom_call.1} parent=47 // pred_check
          %p273 = pneg %p107
        $region54: #{tpu_custom_call.1} parent=47 // pred_check_branch
          %275 = sbr.rel (%p273) target = $region56
        $region55: #{tpu_custom_call.1} parent=47 // pred_region
          %276 = dma.done [#allocation6], 1024
        $region56: #{tpu_custom_call.1} parent=47 // pred_fallthru
          _
        %s277 = smul.u32 16, %s23
        %p278 = scmp.lt.s32.totalorder %s277, 31
        %s279 = scalar_select %p278, %s277, 31
        %s280 = smul.addr %s279, 8
        %s281 = scalar_lea.vmem %s0, %s280
        %p282 = pneg %p44
        %p283 = pneg %p41
        %p284 = pneg %p65
        %p285 = pneg %p62
        %p286 = pneg %p86
        %p287 = pneg %p83
        %p288 = pneg %p107
        %p289 = pneg %p104
        %p290 = pneg %p128
        %p291 = pneg %p125
        %p292 = pneg %p149
        %p293 = pneg %p146
        %p294 = pneg %p170
        %p295 = pneg %p167
        %p296 = pneg %p196
        %p297 = pneg %p193
        %s298 = sand.u32 %s183, 1
        %s299 = scalar_lea.sflag [#allocation4], %s298
        %s300 = sand.u32 %s183, 1
        %s301 = smul.addr %s300, 256
        %s302 = scalar_lea.vmem [#allocation7], %s301
        %s303 = smul.u32 16, %s23
        %p304 = scmp.lt.s32.totalorder %s303, 31
        %s305 = scalar_select %p304, %s303, 31
        %s306 = smul.addr %s305, 8
        %s307 = scalar_lea.vmem %s0, %s306
        %s308 = smul.u32 16, %s23
        %s309 = smul.u32 16, %s23
        %v311 = vlaneseq
        %v312 = vand.u32 %v311, 127
        %v313 = vadd.s32 %v312, 128
        %v314 = vld [vmem:[%s307] sm:$0xff]
        %v315 = vld [vmem:[%s307 + $0x8] sm:$0xff]
        %v316 = vld [vmem:[%s307 + $0x10] sm:$0xff]
        %v317 = vld [vmem:[%s307 + $0x18] sm:$0xff]
        %v318 = vld [vmem:[%s307 + $0x20] sm:$0xff]
        %v319 = vld [vmem:[%s307 + $0x28] sm:$0xff]
        %v320 = vld [vmem:[%s307 + $0x30] sm:$0xff]
        %v321 = vld [vmem:[%s307 + $0x38] sm:$0xff]
        %v322 = vld [vmem:[%s307 + $0x40] sm:$0xff]
        %v323 = vld [vmem:[%s307 + $0x48] sm:$0xff]
        %v324 = vld [vmem:[%s307 + $0x50] sm:$0xff]
        %v325 = vld [vmem:[%s307 + $0x58] sm:$0xff]
        %v326 = vld [vmem:[%s307 + $0x60] sm:$0xff]
        %v327 = vld [vmem:[%s307 + $0x68] sm:$0xff]
        %v328 = vld [vmem:[%s307 + $0x70] sm:$0xff]
        %v329 = vld [vmem:[%s307 + $0x78] sm:$0xff]
        %330 = vset.pattern.permute.xlu0 0
        %331 = vperm.xlu0 %330, %v314
        %v332 = vpop.permute.xlu0 %331
        %333 = vset.pattern.permute.xlu0 0
        %334 = vperm.xlu0 %333, %v315
        %v335 = vpop.permute.xlu0 %334
        %336 = vset.pattern.permute.xlu0 0
        %337 = vperm.xlu0 %336, %v316
        %v338 = vpop.permute.xlu0 %337
        %339 = vset.pattern.permute.xlu0 0
        %340 = vperm.xlu0 %339, %v317
        %v341 = vpop.permute.xlu0 %340
        %342 = vset.pattern.permute.xlu0 0
        %343 = vperm.xlu0 %342, %v318
        %v344 = vpop.permute.xlu0 %343
        %345 = vset.pattern.permute.xlu0 0
        %346 = vperm.xlu0 %345, %v319
        %v347 = vpop.permute.xlu0 %346
        %348 = vset.pattern.permute.xlu0 0
        %349 = vperm.xlu0 %348, %v320
        %v350 = vpop.permute.xlu0 %349
        %351 = vset.pattern.permute.xlu0 0
        %352 = vperm.xlu0 %351, %v321
        %v353 = vpop.permute.xlu0 %352
        %354 = vset.pattern.permute.xlu0 0
        %355 = vperm.xlu0 %354, %v322
        %v356 = vpop.permute.xlu0 %355
        %357 = vset.pattern.permute.xlu0 0
        %358 = vperm.xlu0 %357, %v323
        %v359 = vpop.permute.xlu0 %358
        %360 = vset.pattern.permute.xlu0 0
        %361 = vperm.xlu0 %360, %v324
        %v362 = vpop.permute.xlu0 %361
        %363 = vset.pattern.permute.xlu0 0
        %364 = vperm.xlu0 %363, %v325
        %v365 = vpop.permute.xlu0 %364
        %366 = vset.pattern.permute.xlu0 0
        %367 = vperm.xlu0 %366, %v326
        %v368 = vpop.permute.xlu0 %367
        %369 = vset.pattern.permute.xlu0 0
        %370 = vperm.xlu0 %369, %v327
        %v371 = vpop.permute.xlu0 %370
        %372 = vset.pattern.permute.xlu0 0
        %373 = vperm.xlu0 %372, %v328
        %v374 = vpop.permute.xlu0 %373
        %375 = vset.pattern.permute.xlu0 0
        %376 = vperm.xlu0 %375, %v329
        %v377 = vpop.permute.xlu0 %376
        %vm378 = vcmp.eq.s32.totalorder %v312, %v332
        %vm379 = vcmp.eq.s32.totalorder %v313, %v332
        %vm380 = vcmp.eq.s32.totalorder %v312, %v335
        %vm381 = vcmp.eq.s32.totalorder %v313, %v335
        %vm382 = vcmp.eq.s32.totalorder %v312, %v338
        %vm383 = vcmp.eq.s32.totalorder %v313, %v338
        %vm384 = vcmp.eq.s32.totalorder %v312, %v341
        %vm385 = vcmp.eq.s32.totalorder %v313, %v341
        %vm386 = vcmp.eq.s32.totalorder %v312, %v344
        %vm387 = vcmp.eq.s32.totalorder %v313, %v344
        %vm388 = vcmp.eq.s32.totalorder %v312, %v347
        %vm389 = vcmp.eq.s32.totalorder %v313, %v347
        %vm390 = vcmp.eq.s32.totalorder %v312, %v350
        %vm391 = vcmp.eq.s32.totalorder %v313, %v350
        %vm392 = vcmp.eq.s32.totalorder %v312, %v353
        %vm393 = vcmp.eq.s32.totalorder %v313, %v353
        %vm394 = vcmp.eq.s32.totalorder %v312, %v356
        %vm395 = vcmp.eq.s32.totalorder %v313, %v356
        %vm396 = vcmp.eq.s32.totalorder %v312, %v359
        %vm397 = vcmp.eq.s32.totalorder %v313, %v359
        %vm398 = vcmp.eq.s32.totalorder %v312, %v362
        %vm399 = vcmp.eq.s32.totalorder %v313, %v362
        %vm400 = vcmp.eq.s32.totalorder %v312, %v365
        %vm401 = vcmp.eq.s32.totalorder %v313, %v365
        %vm402 = vcmp.eq.s32.totalorder %v312, %v368
        %vm403 = vcmp.eq.s32.totalorder %v313, %v368
        %vm404 = vcmp.eq.s32.totalorder %v312, %v371
        %vm405 = vcmp.eq.s32.totalorder %v313, %v371
        %vm406 = vcmp.eq.s32.totalorder %v312, %v374
        %vm407 = vcmp.eq.s32.totalorder %v313, %v374
        %vm408 = vcmp.eq.s32.totalorder %v312, %v377
        %vm409 = vcmp.eq.s32.totalorder %v313, %v377
        %v410 = vsel %vm378, 1, 0
        %v411 = vsel %vm379, 1, 0
        %v412 = vsel %vm380, 1, 0
        %v413 = vsel %vm381, 1, 0
        %v414 = vsel %vm382, 1, 0
        %v415 = vsel %vm383, 1, 0
        %v416 = vsel %vm384, 1, 0
        %v417 = vsel %vm385, 1, 0
        %v418 = vsel %vm386, 1, 0
        %v419 = vsel %vm387, 1, 0
        %v420 = vsel %vm388, 1, 0
        %v421 = vsel %vm389, 1, 0
        %v422 = vsel %vm390, 1, 0
        %v423 = vsel %vm391, 1, 0
        %v424 = vsel %vm392, 1, 0
        %v425 = vsel %vm393, 1, 0
        %v426 = vsel %vm394, 1, 0
        %v427 = vsel %vm395, 1, 0
        %v428 = vsel %vm396, 1, 0
        %v429 = vsel %vm397, 1, 0
        %v430 = vsel %vm398, 1, 0
        %v431 = vsel %vm399, 1, 0
        %v432 = vsel %vm400, 1, 0
        %v433 = vsel %vm401, 1, 0
        %v434 = vsel %vm402, 1, 0
        %v435 = vsel %vm403, 1, 0
        %v436 = vsel %vm404, 1, 0
        %v437 = vsel %vm405, 1, 0
        %v438 = vsel %vm406, 1, 0
        %v439 = vsel %vm407, 1, 0
        %v440 = vsel %vm408, 1, 0
        %v441 = vsel %vm409, 1, 0
        %v442 = vcvt.s32.f32 %v410
        %v443 = vcvt.s32.f32 %v411
        %v444 = vcvt.s32.f32 %v412
        %v445 = vcvt.s32.f32 %v413
        %v446 = vcvt.s32.f32 %v414
        %v447 = vcvt.s32.f32 %v415
        %v448 = vcvt.s32.f32 %v416
        %v449 = vcvt.s32.f32 %v417
        %v450 = vcvt.s32.f32 %v418
        %v451 = vcvt.s32.f32 %v419
        %v452 = vcvt.s32.f32 %v420
        %v453 = vcvt.s32.f32 %v421
        %v454 = vcvt.s32.f32 %v422
        %v455 = vcvt.s32.f32 %v423
        %v456 = vcvt.s32.f32 %v424
        %v457 = vcvt.s32.f32 %v425
        %v458 = vcvt.s32.f32 %v426
        %v459 = vcvt.s32.f32 %v427
        %v460 = vcvt.s32.f32 %v428
        %v461 = vcvt.s32.f32 %v429
        %v462 = vcvt.s32.f32 %v430
        %v463 = vcvt.s32.f32 %v431
        %v464 = vcvt.s32.f32 %v432
        %v465 = vcvt.s32.f32 %v433
        %v466 = vcvt.s32.f32 %v434
        %v467 = vcvt.s32.f32 %v435
        %v468 = vcvt.s32.f32 %v436
        %v469 = vcvt.s32.f32 %v437
        %v470 = vcvt.s32.f32 %v438
        %v471 = vcvt.s32.f32 %v439
        %v472 = vcvt.s32.f32 %v440
        %v473 = vcvt.s32.f32 %v441
        %v474 = vadd.f32 %v442, 0.0
        %v475 = vadd.f32 %v443, 0.0
        %v476 = vadd.f32 %v444, 0.0
        %v477 = vadd.f32 %v445, 0.0
        %v478 = vadd.f32 %v446, 0.0
        %v479 = vadd.f32 %v447, 0.0
        %v480 = vadd.f32 %v448, 0.0
        %v481 = vadd.f32 %v449, 0.0
        %v482 = vadd.f32 %v450, 0.0
        %v483 = vadd.f32 %v451, 0.0
        %v484 = vadd.f32 %v452, 0.0
        %v485 = vadd.f32 %v453, 0.0
        %v486 = vadd.f32 %v454, 0.0
        %v487 = vadd.f32 %v455, 0.0
        %v488 = vadd.f32 %v456, 0.0
        %v489 = vadd.f32 %v457, 0.0
        %v490 = vadd.f32 %v458, 0.0
        %v491 = vadd.f32 %v459, 0.0
        %v492 = vadd.f32 %v460, 0.0
        %v493 = vadd.f32 %v461, 0.0
        %v494 = vadd.f32 %v462, 0.0
        %v495 = vadd.f32 %v463, 0.0
        %v496 = vadd.f32 %v464, 0.0
        %v497 = vadd.f32 %v465, 0.0
        %v498 = vadd.f32 %v466, 0.0
        %v499 = vadd.f32 %v467, 0.0
        %v500 = vadd.f32 %v468, 0.0
        %v501 = vadd.f32 %v469, 0.0
        %v502 = vadd.f32 %v470, 0.0
        %v503 = vadd.f32 %v471, 0.0
        %v504 = vadd.f32 %v472, 0.0
        %v505 = vadd.f32 %v473, 0.0
        %506 = vset.pattern.permute.xlu0 1
        %507 = vperm.xlu0 %506, %v314
        %v508 = vpop.permute.xlu0 %507
        %509 = vset.pattern.permute.xlu0 1
        %510 = vperm.xlu0 %509, %v315
        %v511 = vpop.permute.xlu0 %510
        %512 = vset.pattern.permute.xlu0 1
        %513 = vperm.xlu0 %512, %v316
        %v514 = vpop.permute.xlu0 %513
        %515 = vset.pattern.permute.xlu0 1
        %516 = vperm.xlu0 %515, %v317
        %v517 = vpop.permute.xlu0 %516
        %518 = vset.pattern.permute.xlu0 1
        %519 = vperm.xlu0 %518, %v318
        %v520 = vpop.permute.xlu0 %519
        %521 = vset.pattern.permute.xlu0 1
        %522 = vperm.xlu0 %521, %v319
        %v523 = vpop.permute.xlu0 %522
        %524 = vset.pattern.permute.xlu0 1
        %525 = vperm.xlu0 %524, %v320
        %v526 = vpop.permute.xlu0 %525
        %527 = vset.pattern.permute.xlu0 1
        %528 = vperm.xlu0 %527, %v321
        %v529 = vpop.permute.xlu0 %528
        %530 = vset.pattern.permute.xlu0 1
        %531 = vperm.xlu0 %530, %v322
        %v532 = vpop.permute.xlu0 %531
        %533 = vset.pattern.permute.xlu0 1
        %534 = vperm.xlu0 %533, %v323
        %v535 = vpop.permute.xlu0 %534
        %536 = vset.pattern.permute.xlu0 1
        %537 = vperm.xlu0 %536, %v324
        %v538 = vpop.permute.xlu0 %537
        %539 = vset.pattern.permute.xlu0 1
        %540 = vperm.xlu0 %539, %v325
        %v541 = vpop.permute.xlu0 %540
        %542 = vset.pattern.permute.xlu0 1
        %543 = vperm.xlu0 %542, %v326
        %v544 = vpop.permute.xlu0 %543
        %545 = vset.pattern.permute.xlu0 1
        %546 = vperm.xlu0 %545, %v327
        %v547 = vpop.permute.xlu0 %546
        %548 = vset.pattern.permute.xlu0 1
        %549 = vperm.xlu0 %548, %v328
        %v550 = vpop.permute.xlu0 %549
        %551 = vset.pattern.permute.xlu0 1
        %552 = vperm.xlu0 %551, %v329
        %v553 = vpop.permute.xlu0 %552
        %vm554 = vcmp.eq.s32.totalorder %v312, %v508
        %vm555 = vcmp.eq.s32.totalorder %v313, %v508
        %vm556 = vcmp.eq.s32.totalorder %v312, %v511
        %vm557 = vcmp.eq.s32.totalorder %v313, %v511
        %vm558 = vcmp.eq.s32.totalorder %v312, %v514
        %vm559 = vcmp.eq.s32.totalorder %v313, %v514
        %vm560 = vcmp.eq.s32.totalorder %v312, %v517
        %vm561 = vcmp.eq.s32.totalorder %v313, %v517
        %vm562 = vcmp.eq.s32.totalorder %v312, %v520
        %vm563 = vcmp.eq.s32.totalorder %v313, %v520
        %vm564 = vcmp.eq.s32.totalorder %v312, %v523
        %vm565 = vcmp.eq.s32.totalorder %v313, %v523
        %vm566 = vcmp.eq.s32.totalorder %v312, %v526
        %vm567 = vcmp.eq.s32.totalorder %v313, %v526
        %vm568 = vcmp.eq.s32.totalorder %v312, %v529
        %vm569 = vcmp.eq.s32.totalorder %v313, %v529
        %vm570 = vcmp.eq.s32.totalorder %v312, %v532
        %vm571 = vcmp.eq.s32.totalorder %v313, %v532
        %vm572 = vcmp.eq.s32.totalorder %v312, %v535
        %vm573 = vcmp.eq.s32.totalorder %v313, %v535
        %vm574 = vcmp.eq.s32.totalorder %v312, %v538
        %vm575 = vcmp.eq.s32.totalorder %v313, %v538
        %vm576 = vcmp.eq.s32.totalorder %v312, %v541
        %vm577 = vcmp.eq.s32.totalorder %v313, %v541
        %vm578 = vcmp.eq.s32.totalorder %v312, %v544
        %vm579 = vcmp.eq.s32.totalorder %v313, %v544
        %vm580 = vcmp.eq.s32.totalorder %v312, %v547
        %vm581 = vcmp.eq.s32.totalorder %v313, %v547
        %vm582 = vcmp.eq.s32.totalorder %v312, %v550
        %vm583 = vcmp.eq.s32.totalorder %v313, %v550
        %vm584 = vcmp.eq.s32.totalorder %v312, %v553
        %vm585 = vcmp.eq.s32.totalorder %v313, %v553
        %v586 = vsel %vm554, 1, 0
        %v587 = vsel %vm555, 1, 0
        %v588 = vsel %vm556, 1, 0
        %v589 = vsel %vm557, 1, 0
        %v590 = vsel %vm558, 1, 0
        %v591 = vsel %vm559, 1, 0
        %v592 = vsel %vm560, 1, 0
        %v593 = vsel %vm561, 1, 0
        %v594 = vsel %vm562, 1, 0
        %v595 = vsel %vm563, 1, 0
        %v596 = vsel %vm564, 1, 0
        %v597 = vsel %vm565, 1, 0
        %v598 = vsel %vm566, 1, 0
        %v599 = vsel %vm567, 1, 0
        %v600 = vsel %vm568, 1, 0
        %v601 = vsel %vm569, 1, 0
        %v602 = vsel %vm570, 1, 0
        %v603 = vsel %vm571, 1, 0
        %v604 = vsel %vm572, 1, 0
        %v605 = vsel %vm573, 1, 0
        %v606 = vsel %vm574, 1, 0
        %v607 = vsel %vm575, 1, 0
        %v608 = vsel %vm576, 1, 0
        %v609 = vsel %vm577, 1, 0
        %v610 = vsel %vm578, 1, 0
        %v611 = vsel %vm579, 1, 0
        %v612 = vsel %vm580, 1, 0
        %v613 = vsel %vm581, 1, 0
        %v614 = vsel %vm582, 1, 0
        %v615 = vsel %vm583, 1, 0
        %v616 = vsel %vm584, 1, 0
        %v617 = vsel %vm585, 1, 0
        %v618 = vcvt.s32.f32 %v586
        %v619 = vcvt.s32.f32 %v587
        %v620 = vcvt.s32.f32 %v588
        %v621 = vcvt.s32.f32 %v589
        %v622 = vcvt.s32.f32 %v590
        %v623 = vcvt.s32.f32 %v591
        %v624 = vcvt.s32.f32 %v592
        %v625 = vcvt.s32.f32 %v593
        %v626 = vcvt.s32.f32 %v594
        %v627 = vcvt.s32.f32 %v595
        %v628 = vcvt.s32.f32 %v596
        %v629 = vcvt.s32.f32 %v597
        %v630 = vcvt.s32.f32 %v598
        %v631 = vcvt.s32.f32 %v599
        %v632 = vcvt.s32.f32 %v600
        %v633 = vcvt.s32.f32 %v601
        %v634 = vcvt.s32.f32 %v602
        %v635 = vcvt.s32.f32 %v603
        %v636 = vcvt.s32.f32 %v604
        %v637 = vcvt.s32.f32 %v605
        %v638 = vcvt.s32.f32 %v606
        %v639 = vcvt.s32.f32 %v607
        %v640 = vcvt.s32.f32 %v608
        %v641 = vcvt.s32.f32 %v609
        %v642 = vcvt.s32.f32 %v610
        %v643 = vcvt.s32.f32 %v611
        %v644 = vcvt.s32.f32 %v612
        %v645 = vcvt.s32.f32 %v613
        %v646 = vcvt.s32.f32 %v614
        %v647 = vcvt.s32.f32 %v615
        %v648 = vcvt.s32.f32 %v616
        %v649 = vcvt.s32.f32 %v617
        %v650 = vadd.f32 %v474, %v618
        %v651 = vadd.f32 %v475, %v619
        %v652 = vadd.f32 %v476, %v620
        %v653 = vadd.f32 %v477, %v621
        %v654 = vadd.f32 %v478, %v622
        %v655 = vadd.f32 %v479, %v623
        %v656 = vadd.f32 %v480, %v624
        %v657 = vadd.f32 %v481, %v625
        %v658 = vadd.f32 %v482, %v626
        %v659 = vadd.f32 %v483, %v627
        %v660 = vadd.f32 %v484, %v628
        %v661 = vadd.f32 %v485, %v629
        %v662 = vadd.f32 %v486, %v630
        %v663 = vadd.f32 %v487, %v631
        %v664 = vadd.f32 %v488, %v632
        %v665 = vadd.f32 %v489, %v633
        %v666 = vadd.f32 %v490, %v634
        %v667 = vadd.f32 %v491, %v635
        %v668 = vadd.f32 %v492, %v636
        %v669 = vadd.f32 %v493, %v637
        %v670 = vadd.f32 %v494, %v638
        %v671 = vadd.f32 %v495, %v639
        %v672 = vadd.f32 %v496, %v640
        %v673 = vadd.f32 %v497, %v641
        %v674 = vadd.f32 %v498, %v642
        %v675 = vadd.f32 %v499, %v643
        %v676 = vadd.f32 %v500, %v644
        %v677 = vadd.f32 %v501, %v645
        %v678 = vadd.f32 %v502, %v646
        %v679 = vadd.f32 %v503, %v647
        %v680 = vadd.f32 %v504, %v648
        %v681 = vadd.f32 %v505, %v649
        %682 = vset.pattern.permute.xlu0 2
        %683 = vperm.xlu0 %682, %v314
        %v684 = vpop.permute.xlu0 %683
        %685 = vset.pattern.permute.xlu0 2
        %686 = vperm.xlu0 %685, %v315
        %v687 = vpop.permute.xlu0 %686
        %688 = vset.pattern.permute.xlu0 2
        %689 = vperm.xlu0 %688, %v316
        %v690 = vpop.permute.xlu0 %689
        %691 = vset.pattern.permute.xlu0 2
        %692 = vperm.xlu0 %691, %v317
        %v693 = vpop.permute.xlu0 %692
        %694 = vset.pattern.permute.xlu0 2
        %695 = vperm.xlu0 %694, %v318
        %v696 = vpop.permute.xlu0 %695
        %697 = vset.pattern.permute.xlu0 2
        %698 = vperm.xlu0 %697, %v319
        %v699 = vpop.permute.xlu0 %698
        %700 = vset.pattern.permute.xlu0 2
        %701 = vperm.xlu0 %700, %v320
        %v702 = vpop.permute.xlu0 %701
        %703 = vset.pattern.permute.xlu0 2
        %704 = vperm.xlu0 %703, %v321
        %v705 = vpop.permute.xlu0 %704
        %706 = vset.pattern.permute.xlu0 2
        %707 = vperm.xlu0 %706, %v322
        %v708 = vpop.permute.xlu0 %707
        %709 = vset.pattern.permute.xlu0 2
        %710 = vperm.xlu0 %709, %v323
        %v711 = vpop.permute.xlu0 %710
        %712 = vset.pattern.permute.xlu0 2
        %713 = vperm.xlu0 %712, %v324
        %v714 = vpop.permute.xlu0 %713
        %715 = vset.pattern.permute.xlu0 2
        %716 = vperm.xlu0 %715, %v325
        %v717 = vpop.permute.xlu0 %716
        %718 = vset.pattern.permute.xlu0 2
        %719 = vperm.xlu0 %718, %v326
        %v720 = vpop.permute.xlu0 %719
        %721 = vset.pattern.permute.xlu0 2
        %722 = vperm.xlu0 %721, %v327
        %v723 = vpop.permute.xlu0 %722
        %724 = vset.pattern.permute.xlu0 2
        %725 = vperm.xlu0 %724, %v328
        %v726 = vpop.permute.xlu0 %725
        %727 = vset.pattern.permute.xlu0 2
        %728 = vperm.xlu0 %727, %v329
        %v729 = vpop.permute.xlu0 %728
        %vm730 = vcmp.eq.s32.totalorder %v312, %v684
        %vm731 = vcmp.eq.s32.totalorder %v313, %v684
        %vm732 = vcmp.eq.s32.totalorder %v312, %v687
        %vm733 = vcmp.eq.s32.totalorder %v313, %v687
        %vm734 = vcmp.eq.s32.totalorder %v312, %v690
        %vm735 = vcmp.eq.s32.totalorder %v313, %v690
        %vm736 = vcmp.eq.s32.totalorder %v312, %v693
        %vm737 = vcmp.eq.s32.totalorder %v313, %v693
        %vm738 = vcmp.eq.s32.totalorder %v312, %v696
        %vm739 = vcmp.eq.s32.totalorder %v313, %v696
        %vm740 = vcmp.eq.s32.totalorder %v312, %v699
        %vm741 = vcmp.eq.s32.totalorder %v313, %v699
        %vm742 = vcmp.eq.s32.totalorder %v312, %v702
        %vm743 = vcmp.eq.s32.totalorder %v313, %v702
        %vm744 = vcmp.eq.s32.totalorder %v312, %v705
        %vm745 = vcmp.eq.s32.totalorder %v313, %v705
        %vm746 = vcmp.eq.s32.totalorder %v312, %v708
        %vm747 = vcmp.eq.s32.totalorder %v313, %v708
        %vm748 = vcmp.eq.s32.totalorder %v312, %v711
        %vm749 = vcmp.eq.s32.totalorder %v313, %v711
        %vm750 = vcmp.eq.s32.totalorder %v312, %v714
        %vm751 = vcmp.eq.s32.totalorder %v313, %v714
        %vm752 = vcmp.eq.s32.totalorder %v312, %v717
        %vm753 = vcmp.eq.s32.totalorder %v313, %v717
        %vm754 = vcmp.eq.s32.totalorder %v312, %v720
        %vm755 = vcmp.eq.s32.totalorder %v313, %v720
        %vm756 = vcmp.eq.s32.totalorder %v312, %v723
        %vm757 = vcmp.eq.s32.totalorder %v313, %v723
        %vm758 = vcmp.eq.s32.totalorder %v312, %v726
        %vm759 = vcmp.eq.s32.totalorder %v313, %v726
        %vm760 = vcmp.eq.s32.totalorder %v312, %v729
        %vm761 = vcmp.eq.s32.totalorder %v313, %v729
        %v762 = vsel %vm730, 1, 0
        %v763 = vsel %vm731, 1, 0
        %v764 = vsel %vm732, 1, 0
        %v765 = vsel %vm733, 1, 0
        %v766 = vsel %vm734, 1, 0
        %v767 = vsel %vm735, 1, 0
        %v768 = vsel %vm736, 1, 0
        %v769 = vsel %vm737, 1, 0
        %v770 = vsel %vm738, 1, 0
        %v771 = vsel %vm739, 1, 0
        %v772 = vsel %vm740, 1, 0
        %v773 = vsel %vm741, 1, 0
        %v774 = vsel %vm742, 1, 0
        %v775 = vsel %vm743, 1, 0
        %v776 = vsel %vm744, 1, 0
        %v777 = vsel %vm745, 1, 0
        %v778 = vsel %vm746, 1, 0
        %v779 = vsel %vm747, 1, 0
        %v780 = vsel %vm748, 1, 0
        %v781 = vsel %vm749, 1, 0
        %v782 = vsel %vm750, 1, 0
        %v783 = vsel %vm751, 1, 0
        %v784 = vsel %vm752, 1, 0
        %v785 = vsel %vm753, 1, 0
        %v786 = vsel %vm754, 1, 0
        %v787 = vsel %vm755, 1, 0
        %v788 = vsel %vm756, 1, 0
        %v789 = vsel %vm757, 1, 0
        %v790 = vsel %vm758, 1, 0
        %v791 = vsel %vm759, 1, 0
        %v792 = vsel %vm760, 1, 0
        %v793 = vsel %vm761, 1, 0
        %v794 = vcvt.s32.f32 %v762
        %v795 = vcvt.s32.f32 %v763
        %v796 = vcvt.s32.f32 %v764
        %v797 = vcvt.s32.f32 %v765
        %v798 = vcvt.s32.f32 %v766
        %v799 = vcvt.s32.f32 %v767
        %v800 = vcvt.s32.f32 %v768
        %v801 = vcvt.s32.f32 %v769
        %v802 = vcvt.s32.f32 %v770
        %v803 = vcvt.s32.f32 %v771
        %v804 = vcvt.s32.f32 %v772
        %v805 = vcvt.s32.f32 %v773
        %v806 = vcvt.s32.f32 %v774
        %v807 = vcvt.s32.f32 %v775
        %v808 = vcvt.s32.f32 %v776
        %v809 = vcvt.s32.f32 %v777
        %v810 = vcvt.s32.f32 %v778
        %v811 = vcvt.s32.f32 %v779
        %v812 = vcvt.s32.f32 %v780
        %v813 = vcvt.s32.f32 %v781
        %v814 = vcvt.s32.f32 %v782
        %v815 = vcvt.s32.f32 %v783
        %v816 = vcvt.s32.f32 %v784
        %v817 = vcvt.s32.f32 %v785
        %v818 = vcvt.s32.f32 %v786
        %v819 = vcvt.s32.f32 %v787
        %v820 = vcvt.s32.f32 %v788
        %v821 = vcvt.s32.f32 %v789
        %v822 = vcvt.s32.f32 %v790
        %v823 = vcvt.s32.f32 %v791
        %v824 = vcvt.s32.f32 %v792
        %v825 = vcvt.s32.f32 %v793
        %v826 = vadd.f32 %v650, %v794
        %v827 = vadd.f32 %v651, %v795
        %v828 = vadd.f32 %v652, %v796
        %v829 = vadd.f32 %v653, %v797
        %v830 = vadd.f32 %v654, %v798
        %v831 = vadd.f32 %v655, %v799
        %v832 = vadd.f32 %v656, %v800
        %v833 = vadd.f32 %v657, %v801
        %v834 = vadd.f32 %v658, %v802
        %v835 = vadd.f32 %v659, %v803
        %v836 = vadd.f32 %v660, %v804
        %v837 = vadd.f32 %v661, %v805
        %v838 = vadd.f32 %v662, %v806
        %v839 = vadd.f32 %v663, %v807
        %v840 = vadd.f32 %v664, %v808
        %v841 = vadd.f32 %v665, %v809
        %v842 = vadd.f32 %v666, %v810
        %v843 = vadd.f32 %v667, %v811
        %v844 = vadd.f32 %v668, %v812
        %v845 = vadd.f32 %v669, %v813
        %v846 = vadd.f32 %v670, %v814
        %v847 = vadd.f32 %v671, %v815
        %v848 = vadd.f32 %v672, %v816
        %v849 = vadd.f32 %v673, %v817
        %v850 = vadd.f32 %v674, %v818
        %v851 = vadd.f32 %v675, %v819
        %v852 = vadd.f32 %v676, %v820
        %v853 = vadd.f32 %v677, %v821
        %v854 = vadd.f32 %v678, %v822
        %v855 = vadd.f32 %v679, %v823
        %v856 = vadd.f32 %v680, %v824
        %v857 = vadd.f32 %v681, %v825
        %858 = vset.pattern.permute.xlu0 3
        %859 = vperm.xlu0 %858, %v314
        %v860 = vpop.permute.xlu0 %859
        %861 = vset.pattern.permute.xlu0 3
        %862 = vperm.xlu0 %861, %v315
        %v863 = vpop.permute.xlu0 %862
        %864 = vset.pattern.permute.xlu0 3
        %865 = vperm.xlu0 %864, %v316
        %v866 = vpop.permute.xlu0 %865
        %867 = vset.pattern.permute.xlu0 3
        %868 = vperm.xlu0 %867, %v317
        %v869 = vpop.permute.xlu0 %868
        %870 = vset.pattern.permute.xlu0 3
        %871 = vperm.xlu0 %870, %v318
        %v872 = vpop.permute.xlu0 %871
        %873 = vset.pattern.permute.xlu0 3
        %874 = vperm.xlu0 %873, %v319
        %v875 = vpop.permute.xlu0 %874
        %876 = vset.pattern.permute.xlu0 3
        %877 = vperm.xlu0 %876, %v320
        %v878 = vpop.permute.xlu0 %877
        %879 = vset.pattern.permute.xlu0 3
        %880 = vperm.xlu0 %879, %v321
        %v881 = vpop.permute.xlu0 %880
        %882 = vset.pattern.permute.xlu0 3
        %883 = vperm.xlu0 %882, %v322
        %v884 = vpop.permute.xlu0 %883
        %885 = vset.pattern.permute.xlu0 3
        %886 = vperm.xlu0 %885, %v323
        %v887 = vpop.permute.xlu0 %886
        %888 = vset.pattern.permute.xlu0 3
        %889 = vperm.xlu0 %888, %v324
        %v890 = vpop.permute.xlu0 %889
        %891 = vset.pattern.permute.xlu0 3
        %892 = vperm.xlu0 %891, %v325
        %v893 = vpop.permute.xlu0 %892
        %894 = vset.pattern.permute.xlu0 3
        %895 = vperm.xlu0 %894, %v326
        %v896 = vpop.permute.xlu0 %895
        %897 = vset.pattern.permute.xlu0 3
        %898 = vperm.xlu0 %897, %v327
        %v899 = vpop.permute.xlu0 %898
        %900 = vset.pattern.permute.xlu0 3
        %901 = vperm.xlu0 %900, %v328
        %v902 = vpop.permute.xlu0 %901
        %903 = vset.pattern.permute.xlu0 3
        %904 = vperm.xlu0 %903, %v329
        %v905 = vpop.permute.xlu0 %904
        %vm906 = vcmp.eq.s32.totalorder %v312, %v860
        %vm907 = vcmp.eq.s32.totalorder %v313, %v860
        %vm908 = vcmp.eq.s32.totalorder %v312, %v863
        %vm909 = vcmp.eq.s32.totalorder %v313, %v863
        %vm910 = vcmp.eq.s32.totalorder %v312, %v866
        %vm911 = vcmp.eq.s32.totalorder %v313, %v866
        %vm912 = vcmp.eq.s32.totalorder %v312, %v869
        %vm913 = vcmp.eq.s32.totalorder %v313, %v869
        %vm914 = vcmp.eq.s32.totalorder %v312, %v872
        %vm915 = vcmp.eq.s32.totalorder %v313, %v872
        %vm916 = vcmp.eq.s32.totalorder %v312, %v875
        %vm917 = vcmp.eq.s32.totalorder %v313, %v875
        %vm918 = vcmp.eq.s32.totalorder %v312, %v878
        %vm919 = vcmp.eq.s32.totalorder %v313, %v878
        %vm920 = vcmp.eq.s32.totalorder %v312, %v881
        %vm921 = vcmp.eq.s32.totalorder %v313, %v881
        %vm922 = vcmp.eq.s32.totalorder %v312, %v884
        %vm923 = vcmp.eq.s32.totalorder %v313, %v884
        %vm924 = vcmp.eq.s32.totalorder %v312, %v887
        %vm925 = vcmp.eq.s32.totalorder %v313, %v887
        %vm926 = vcmp.eq.s32.totalorder %v312, %v890
        %vm927 = vcmp.eq.s32.totalorder %v313, %v890
        %vm928 = vcmp.eq.s32.totalorder %v312, %v893
        %vm929 = vcmp.eq.s32.totalorder %v313, %v893
        %vm930 = vcmp.eq.s32.totalorder %v312, %v896
        %vm931 = vcmp.eq.s32.totalorder %v313, %v896
        %vm932 = vcmp.eq.s32.totalorder %v312, %v899
        %vm933 = vcmp.eq.s32.totalorder %v313, %v899
        %vm934 = vcmp.eq.s32.totalorder %v312, %v902
        %vm935 = vcmp.eq.s32.totalorder %v313, %v902
        %vm936 = vcmp.eq.s32.totalorder %v312, %v905
        %vm937 = vcmp.eq.s32.totalorder %v313, %v905
        %v938 = vsel %vm906, 1, 0
        %v939 = vsel %vm907, 1, 0
        %v940 = vsel %vm908, 1, 0
        %v941 = vsel %vm909, 1, 0
        %v942 = vsel %vm910, 1, 0
        %v943 = vsel %vm911, 1, 0
        %v944 = vsel %vm912, 1, 0
        %v945 = vsel %vm913, 1, 0
        %v946 = vsel %vm914, 1, 0
        %v947 = vsel %vm915, 1, 0
        %v948 = vsel %vm916, 1, 0
        %v949 = vsel %vm917, 1, 0
        %v950 = vsel %vm918, 1, 0
        %v951 = vsel %vm919, 1, 0
        %v952 = vsel %vm920, 1, 0
        %v953 = vsel %vm921, 1, 0
        %v954 = vsel %vm922, 1, 0
        %v955 = vsel %vm923, 1, 0
        %v956 = vsel %vm924, 1, 0
        %v957 = vsel %vm925, 1, 0
        %v958 = vsel %vm926, 1, 0
        %v959 = vsel %vm927, 1, 0
        %v960 = vsel %vm928, 1, 0
        %v961 = vsel %vm929, 1, 0
        %v962 = vsel %vm930, 1, 0
        %v963 = vsel %vm931, 1, 0
        %v964 = vsel %vm932, 1, 0
        %v965 = vsel %vm933, 1, 0
        %v966 = vsel %vm934, 1, 0
        %v967 = vsel %vm935, 1, 0
        %v968 = vsel %vm936, 1, 0
        %v969 = vsel %vm937, 1, 0
        %v970 = vcvt.s32.f32 %v938
        %v971 = vcvt.s32.f32 %v939
        %v972 = vcvt.s32.f32 %v940
        %v973 = vcvt.s32.f32 %v941
        %v974 = vcvt.s32.f32 %v942
        %v975 = vcvt.s32.f32 %v943
        %v976 = vcvt.s32.f32 %v944
        %v977 = vcvt.s32.f32 %v945
        %v978 = vcvt.s32.f32 %v946
        %v979 = vcvt.s32.f32 %v947
        %v980 = vcvt.s32.f32 %v948
        %v981 = vcvt.s32.f32 %v949
        %v982 = vcvt.s32.f32 %v950
        %v983 = vcvt.s32.f32 %v951
        %v984 = vcvt.s32.f32 %v952
        %v985 = vcvt.s32.f32 %v953
        %v986 = vcvt.s32.f32 %v954
        %v987 = vcvt.s32.f32 %v955
        %v988 = vcvt.s32.f32 %v956
        %v989 = vcvt.s32.f32 %v957
        %v990 = vcvt.s32.f32 %v958
        %v991 = vcvt.s32.f32 %v959
        %v992 = vcvt.s32.f32 %v960
        %v993 = vcvt.s32.f32 %v961
        %v994 = vcvt.s32.f32 %v962
        %v995 = vcvt.s32.f32 %v963
        %v996 = vcvt.s32.f32 %v964
        %v997 = vcvt.s32.f32 %v965
        %v998 = vcvt.s32.f32 %v966
        %v999 = vcvt.s32.f32 %v967
        %v1000 = vcvt.s32.f32 %v968
        %v1001 = vcvt.s32.f32 %v969
        %v1002 = vadd.f32 %v826, %v970
        %v1003 = vadd.f32 %v827, %v971
        %v1004 = vadd.f32 %v828, %v972
        %v1005 = vadd.f32 %v829, %v973
        %v1006 = vadd.f32 %v830, %v974
        %v1007 = vadd.f32 %v831, %v975
        %v1008 = vadd.f32 %v832, %v976
        %v1009 = vadd.f32 %v833, %v977
        %v1010 = vadd.f32 %v834, %v978
        %v1011 = vadd.f32 %v835, %v979
        %v1012 = vadd.f32 %v836, %v980
        %v1013 = vadd.f32 %v837, %v981
        %v1014 = vadd.f32 %v838, %v982
        %v1015 = vadd.f32 %v839, %v983
        %v1016 = vadd.f32 %v840, %v984
        %v1017 = vadd.f32 %v841, %v985
        %v1018 = vadd.f32 %v842, %v986
        %v1019 = vadd.f32 %v843, %v987
        %v1020 = vadd.f32 %v844, %v988
        %v1021 = vadd.f32 %v845, %v989
        %v1022 = vadd.f32 %v846, %v990
        %v1023 = vadd.f32 %v847, %v991
        %v1024 = vadd.f32 %v848, %v992
        %v1025 = vadd.f32 %v849, %v993
        %v1026 = vadd.f32 %v850, %v994
        %v1027 = vadd.f32 %v851, %v995
        %v1028 = vadd.f32 %v852, %v996
        %v1029 = vadd.f32 %v853, %v997
        %v1030 = vadd.f32 %v854, %v998
        %v1031 = vadd.f32 %v855, %v999
        %v1032 = vadd.f32 %v856, %v1000
        %v1033 = vadd.f32 %v857, %v1001
        %v1034 = vpack.c.bf16 %v1004, %v1002
        %v1035 = vpack.c.bf16 %v1005, %v1003
        %v1036 = vpack.c.bf16 %v1008, %v1006
        %v1037 = vpack.c.bf16 %v1009, %v1007
        %v1038 = vpack.c.bf16 %v1012, %v1010
        %v1039 = vpack.c.bf16 %v1013, %v1011
        %v1040 = vpack.c.bf16 %v1016, %v1014
        %v1041 = vpack.c.bf16 %v1017, %v1015
        %v1042 = vpack.c.bf16 %v1020, %v1018
        %v1043 = vpack.c.bf16 %v1021, %v1019
        %v1044 = vpack.c.bf16 %v1024, %v1022
        %v1045 = vpack.c.bf16 %v1025, %v1023
        %v1046 = vpack.c.bf16 %v1028, %v1026
        %v1047 = vpack.c.bf16 %v1029, %v1027
        %v1048 = vpack.c.bf16 %v1032, %v1030
        %v1049 = vpack.c.bf16 %v1033, %v1031
        %v1050 = vld [vmem:[%s1] sm:$0xf]
        %v1051 = vld [vmem:[%s1 + $0x4] sm:$0xf]
        %v1052 = vld [vmem:[%s1 + $0x8] sm:$0xf]
        %v1053 = vld [vmem:[%s1 + $0xc] sm:$0xf]
        %v1054 = vld [vmem:[%s1 + $0x10] sm:$0xf]
        %v1055 = vld [vmem:[%s1 + $0x14] sm:$0xf]
        %v1056 = vld [vmem:[%s1 + $0x18] sm:$0xf]
        %v1057 = vld [vmem:[%s1 + $0x1c] sm:$0xf]
        %v1058 = vld [vmem:[%s1 + $0x20] sm:$0xf]
        %v1059 = vld [vmem:[%s1 + $0x24] sm:$0xf]
        %v1060 = vld [vmem:[%s1 + $0x28] sm:$0xf]
        %v1061 = vld [vmem:[%s1 + $0x2c] sm:$0xf]
        %v1062 = vld [vmem:[%s1 + $0x30] sm:$0xf]
        %v1063 = vld [vmem:[%s1 + $0x34] sm:$0xf]
        %v1064 = vld [vmem:[%s1 + $0x38] sm:$0xf]
        %v1065 = vld [vmem:[%s1 + $0x3c] sm:$0xf]
        %v1066 = vld [vmem:[%s1 + $0x40] sm:$0xf]
        %v1067 = vld [vmem:[%s1 + $0x44] sm:$0xf]
        %v1068 = vld [vmem:[%s1 + $0x48] sm:$0xf]
        %v1069 = vld [vmem:[%s1 + $0x4c] sm:$0xf]
        %v1070 = vld [vmem:[%s1 + $0x50] sm:$0xf]
        %v1071 = vld [vmem:[%s1 + $0x54] sm:$0xf]
        %v1072 = vld [vmem:[%s1 + $0x58] sm:$0xf]
        %v1073 = vld [vmem:[%s1 + $0x5c] sm:$0xf]
        %v1074 = vld [vmem:[%s1 + $0x60] sm:$0xf]
        %v1075 = vld [vmem:[%s1 + $0x64] sm:$0xf]
        %v1076 = vld [vmem:[%s1 + $0x68] sm:$0xf]
        %v1077 = vld [vmem:[%s1 + $0x6c] sm:$0xf]
        %v1078 = vld [vmem:[%s1 + $0x70] sm:$0xf]
        %v1079 = vld [vmem:[%s1 + $0x74] sm:$0xf]
        %v1080 = vld [vmem:[%s1 + $0x78] sm:$0xf]
        %v1081 = vld [vmem:[%s1 + $0x7c] sm:$0xf]
        %v1114 = vunpack.c.l.b16 %v1050
        %v1115 = vunpack.c.l.b16 %v1051
        %v1116 = vunpack.c.l.b16 %v1052
        %v1117 = vunpack.c.l.b16 %v1053
        %v1118 = vunpack.c.l.b16 %v1054
        %v1119 = vunpack.c.l.b16 %v1055
        %v1120 = vunpack.c.l.b16 %v1056
        %v1121 = vunpack.c.l.b16 %v1057
        %v1122 = vunpack.c.l.b16 %v1058
        %v1123 = vunpack.c.l.b16 %v1059
        %v1124 = vunpack.c.l.b16 %v1060
        %v1125 = vunpack.c.l.b16 %v1061
        %v1126 = vunpack.c.l.b16 %v1062
        %v1127 = vunpack.c.l.b16 %v1063
        %v1128 = vunpack.c.l.b16 %v1064
        %v1129 = vunpack.c.l.b16 %v1065
        %v1130 = vunpack.c.l.b16 %v1066
        %v1131 = vunpack.c.l.b16 %v1067
        %v1132 = vunpack.c.l.b16 %v1068
        %v1133 = vunpack.c.l.b16 %v1069
        %v1134 = vunpack.c.l.b16 %v1070
        %v1135 = vunpack.c.l.b16 %v1071
        %v1136 = vunpack.c.l.b16 %v1072
        %v1137 = vunpack.c.l.b16 %v1073
        %v1138 = vunpack.c.l.b16 %v1074
        %v1139 = vunpack.c.l.b16 %v1075
        %v1140 = vunpack.c.l.b16 %v1076
        %v1141 = vunpack.c.l.b16 %v1077
        %v1142 = vunpack.c.l.b16 %v1078
        %v1143 = vunpack.c.l.b16 %v1079
        %v1144 = vunpack.c.l.b16 %v1080
        %v1145 = vunpack.c.l.b16 %v1081
        %v1146 = vpack.c.b16 %v1115, %v1114
        %v1147 = vpack.c.b16 %v1117, %v1116
        %v1148 = vpack.c.b16 %v1119, %v1118
        %v1149 = vpack.c.b16 %v1121, %v1120
        %v1150 = vpack.c.b16 %v1123, %v1122
        %v1151 = vpack.c.b16 %v1125, %v1124
        %v1152 = vpack.c.b16 %v1127, %v1126
        %v1153 = vpack.c.b16 %v1129, %v1128
        %v1154 = vpack.c.b16 %v1131, %v1130
        %v1155 = vpack.c.b16 %v1133, %v1132
        %v1156 = vpack.c.b16 %v1135, %v1134
        %v1157 = vpack.c.b16 %v1137, %v1136
        %v1158 = vpack.c.b16 %v1139, %v1138
        %v1159 = vpack.c.b16 %v1141, %v1140
        %v1160 = vpack.c.b16 %v1143, %v1142
        %v1161 = vpack.c.b16 %v1145, %v1144
        %1178 = vmatprep.subr.bf16.mxu0 0
        %1179 = vmatpush1.bf16.msra.mxu0 %v1146
        %1180 = vmatprep.subr.bf16.mxu0 0
        %1181 = vmatpush1.bf16.msra.mxu0 %v1147
        %1182 = vmatprep.subr.bf16.mxu0 0
        %1183 = vmatpush1.bf16.msra.mxu0 %v1148
        %1184 = vmatprep.subr.bf16.mxu0 0
        %1185 = vmatpush1.bf16.msra.mxu0 %v1149
        %1186 = vmatprep.subr.bf16.mxu0 0
        %1187 = vmatpush1.bf16.msra.mxu0 %v1150
        %1188 = vmatprep.subr.bf16.mxu0 0
        %1189 = vmatpush1.bf16.msra.mxu0 %v1151
        %1190 = vmatprep.subr.bf16.mxu0 0
        %1191 = vmatpush1.bf16.msra.mxu0 %v1152
        %1192 = vmatprep.subr.bf16.mxu0 0
        %1193 = vmatpush1.bf16.msra.mxu0 %v1153
        %1194 = vmatprep.subr.bf16.mxu0 0
        %1195 = vmatpush1.bf16.msra.mxu0 %v1154
        %1196 = vmatprep.subr.bf16.mxu0 0
        %1197 = vmatpush1.bf16.msra.mxu0 %v1155
        %1198 = vmatprep.subr.bf16.mxu0 0
        %1199 = vmatpush1.bf16.msra.mxu0 %v1156
        %1200 = vmatprep.subr.bf16.mxu0 0
        %1201 = vmatpush1.bf16.msra.mxu0 %v1157
        %1202 = vmatprep.subr.bf16.mxu0 0
        %1203 = vmatpush1.bf16.msra.mxu0 %v1158
        %1204 = vmatprep.subr.bf16.mxu0 0
        %1205 = vmatpush1.bf16.msra.mxu0 %v1159
        %1206 = vmatprep.subr.bf16.mxu0 0
        %1207 = vmatpush1.bf16.msra.mxu0 %v1160
        %1208 = vmatprep.subr.bf16.mxu0 0
        %1209 = vmatpush1.bf16.msra.mxu0 %v1161
        %1210 = vmatprep.mubr.bf16.mxu0 %v1035
        %1211 = vmatmul.mubr.bf16.gmra.mrb[0].mxu0 %v1034
        %v1212 = vpop.f32.mrb[0].mxu0
        %v1213 = vadd.f32 0.0, %v1212
        %v1214 = vpop.f32.mrb[0].mxu0
        %v1215 = vpop.f32.mrb[0].mxu0
        %v1216 = vadd.f32 0.0, %v1215
        %v1217 = vpop.f32.mrb[0].mxu0
        %1218 = vmatprep.mubr.bf16.mxu0 %v1037
        %1219 = vmatmul.mubr.bf16.gmra.mrb[0].mxu0 %v1036
        %v1220 = vpop.f32.mrb[0].mxu0
        %v1221 = vadd.f32 0.0, %v1220
        %v1222 = vpop.f32.mrb[0].mxu0
        %v1223 = vpop.f32.mrb[0].mxu0
        %v1224 = vadd.f32 0.0, %v1223
        %v1225 = vpop.f32.mrb[0].mxu0
        %1226 = vmatprep.mubr.bf16.mxu0 %v1039
        %1227 = vmatmul.mubr.bf16.gmra.mrb[0].mxu0 %v1038
        %v1228 = vpop.f32.mrb[0].mxu0
        %v1229 = vadd.f32 0.0, %v1228
        %v1230 = vpop.f32.mrb[0].mxu0
        %v1231 = vpop.f32.mrb[0].mxu0
        %v1232 = vadd.f32 0.0, %v1231
        %v1233 = vpop.f32.mrb[0].mxu0
        %1234 = vmatprep.mubr.bf16.mxu0 %v1041
        %1235 = vmatmul.mubr.bf16.gmra.mrb[0].mxu0 %v1040
        %v1236 = vpop.f32.mrb[0].mxu0
        %v1237 = vadd.f32 0.0, %v1236
        %v1238 = vpop.f32.mrb[0].mxu0
        %v1239 = vpop.f32.mrb[0].mxu0
        %v1240 = vadd.f32 0.0, %v1239
        %v1241 = vpop.f32.mrb[0].mxu0
        %1242 = vmatprep.mubr.bf16.mxu0 %v1043
        %1243 = vmatmul.mubr.bf16.gmra.mrb[0].mxu0 %v1042
        %v1244 = vpop.f32.mrb[0].mxu0
        %v1245 = vadd.f32 0.0, %v1244
        %v1246 = vpop.f32.mrb[0].mxu0
        %v1247 = vpop.f32.mrb[0].mxu0
        %v1248 = vadd.f32 0.0, %v1247
        %v1249 = vpop.f32.mrb[0].mxu0
        %1250 = vmatprep.mubr.bf16.mxu0 %v1045
        %1251 = vmatmul.mubr.bf16.gmra.mrb[0].mxu0 %v1044
        %v1252 = vpop.f32.mrb[0].mxu0
        %v1253 = vadd.f32 0.0, %v1252
        %v1254 = vpop.f32.mrb[0].mxu0
        %v1255 = vpop.f32.mrb[0].mxu0
        %v1256 = vadd.f32 0.0, %v1255
        %v1257 = vpop.f32.mrb[0].mxu0
        %1258 = vmatprep.mubr.bf16.mxu0 %v1047
        %1259 = vmatmul.mubr.bf16.gmra.mrb[0].mxu0 %v1046
        %v1260 = vpop.f32.mrb[0].mxu0
        %v1261 = vadd.f32 0.0, %v1260
        %v1262 = vpop.f32.mrb[0].mxu0
        %v1263 = vpop.f32.mrb[0].mxu0
        %v1264 = vadd.f32 0.0, %v1263
        %v1265 = vpop.f32.mrb[0].mxu0
        %1266 = vmatprep.mubr.bf16.mxu0 %v1049
        %1267 = vmatmul.mubr.bf16.gmra.mrb[0].mxu0 %v1048
        %v1268 = vpop.f32.mrb[0].mxu0
        %v1269 = vadd.f32 0.0, %v1268
        %v1270 = vpop.f32.mrb[0].mxu0
        %v1271 = vpop.f32.mrb[0].mxu0
        %v1272 = vadd.f32 0.0, %v1271
        %v1273 = vpop.f32.mrb[0].mxu0
        %1274 = vdwg.mxu0
        %v1275 = vpack.c.bf16 %v1216, %v1213
        %v1276 = vpack.c.bf16 %v1224, %v1221
        %v1277 = vpack.c.bf16 %v1232, %v1229
        %v1278 = vpack.c.bf16 %v1240, %v1237
        %v1279 = vpack.c.bf16 %v1248, %v1245
        %v1280 = vpack.c.bf16 %v1256, %v1253
        %v1281 = vpack.c.bf16 %v1264, %v1261
        %v1282 = vpack.c.bf16 %v1272, %v1269
        %v1283 = vld [vmem:[#allocation2] sm:$0xf]
        %v1284 = vld [vmem:[#allocation2 + $0x4] sm:$0xf]
        %v1285 = vld [vmem:[#allocation2 + $0x8] sm:$0xf]
        %v1286 = vld [vmem:[#allocation2 + $0xc] sm:$0xf]
        %v1287 = vld [vmem:[#allocation2 + $0x10] sm:$0xf]
        %v1288 = vld [vmem:[#allocation2 + $0x14] sm:$0xf]
        %v1289 = vld [vmem:[#allocation2 + $0x18] sm:$0xf]
        %v1290 = vld [vmem:[#allocation2 + $0x1c] sm:$0xf]
        %v1291 = vld [vmem:[#allocation2 + $0x20] sm:$0xf]
        %v1292 = vld [vmem:[#allocation2 + $0x24] sm:$0xf]
        %v1293 = vld [vmem:[#allocation2 + $0x28] sm:$0xf]
        %v1294 = vld [vmem:[#allocation2 + $0x2c] sm:$0xf]
        %v1295 = vld [vmem:[#allocation2 + $0x30] sm:$0xf]
        %v1296 = vld [vmem:[#allocation2 + $0x34] sm:$0xf]
        %v1297 = vld [vmem:[#allocation2 + $0x38] sm:$0xf]
        %v1298 = vld [vmem:[#allocation2 + $0x3c] sm:$0xf]
        %v1315 = vunpack.c.l.b16 %v1283
        %v1316 = vunpack.c.l.b16 %v1284
        %v1317 = vunpack.c.l.b16 %v1285
        %v1318 = vunpack.c.l.b16 %v1286
        %v1319 = vunpack.c.l.b16 %v1287
        %v1320 = vunpack.c.l.b16 %v1288
        %v1321 = vunpack.c.l.b16 %v1289
        %v1322 = vunpack.c.l.b16 %v1290
        %v1323 = vunpack.c.l.b16 %v1291
        %v1324 = vunpack.c.l.b16 %v1292
        %v1325 = vunpack.c.l.b16 %v1293
        %v1326 = vunpack.c.l.b16 %v1294
        %v1327 = vunpack.c.l.b16 %v1295
        %v1328 = vunpack.c.l.b16 %v1296
        %v1329 = vunpack.c.l.b16 %v1297
        %v1330 = vunpack.c.l.b16 %v1298
        %v1331 = vpack.c.b16 %v1316, %v1315
        %v1332 = vpack.c.b16 %v1318, %v1317
        %v1333 = vpack.c.b16 %v1320, %v1319
        %v1334 = vpack.c.b16 %v1322, %v1321
        %v1335 = vpack.c.b16 %v1324, %v1323
        %v1336 = vpack.c.b16 %v1326, %v1325
        %v1337 = vpack.c.b16 %v1328, %v1327
        %v1338 = vpack.c.b16 %v1330, %v1329
        %1347 = vmatprep.subr.bf16.mxu0 0
        %1348 = vmatpush1.bf16.xpose.msra.mxu0 %v1331
        %1349 = vmatprep.subr.bf16.mxu0 0
        %1350 = vmatpush1.bf16.xpose.msra.mxu0 %v1332
        %1351 = vmatprep.subr.bf16.mxu0 0
        %1352 = vmatpush1.bf16.xpose.msra.mxu0 %v1333
        %1353 = vmatprep.subr.bf16.mxu0 0
        %1354 = vmatpush1.bf16.xpose.msra.mxu0 %v1334
        %1355 = vmatprep.subr.bf16.mxu0 0
        %1356 = vmatpush1.bf16.xpose.msra.mxu0 %v1335
        %1357 = vmatprep.subr.bf16.mxu0 0
        %1358 = vmatpush1.bf16.xpose.msra.mxu0 %v1336
        %1359 = vmatprep.subr.bf16.mxu0 0
        %1360 = vmatpush1.bf16.xpose.msra.mxu0 %v1337
        %1361 = vmatprep.subr.bf16.mxu0 0
        %1362 = vmatpush1.bf16.xpose.msra.mxu0 %v1338
        %1363 = vmatprep.subr.bf16.mxu0 0
        %1364 = vmatpush1.bf16.xpose.msra.mxu0 0
        %1365 = vmatprep.subr.bf16.mxu0 0
        %1366 = vmatpush1.bf16.xpose.msra.mxu0 0
        %1367 = vmatprep.subr.bf16.mxu0 0
        %1368 = vmatpush1.bf16.xpose.msra.mxu0 0
        %1369 = vmatprep.subr.bf16.mxu0 0
        %1370 = vmatpush1.bf16.xpose.msra.mxu0 0
        %1371 = vmatprep.subr.bf16.mxu0 0
        %1372 = vmatpush1.bf16.xpose.msra.mxu0 0
        %1373 = vmatprep.subr.bf16.mxu0 0
        %1374 = vmatpush1.bf16.xpose.msra.mxu0 0
        %1375 = vmatprep.subr.bf16.mxu0 0
        %1376 = vmatpush1.bf16.xpose.msra.mxu0 0
        %1377 = vmatprep.subr.bf16.mxu0 0
        %1378 = vmatpush1.bf16.xpose.msra.mxu0 0
        %1379 = vmatprep.mubr.bf16.mxu0 0
        %1380 = vmatmul.mubr.bf16.gmra.mrb[0].mxu0 %v1275
        %v1381 = vpop.f32.mrb[0].mxu0
        %v1382 = vadd.f32 0.0, %v1381
        %v1383 = vpop.f32.mrb[0].mxu0
        %v1384 = vpop.f32.mrb[0].mxu0
        %v1385 = vadd.f32 0.0, %v1384
        %v1386 = vpop.f32.mrb[0].mxu0
        %1387 = vmatprep.mubr.bf16.mxu0 0
        %1388 = vmatmul.mubr.bf16.gmra.mrb[0].mxu0 %v1276
        %v1389 = vpop.f32.mrb[0].mxu0
        %v1390 = vadd.f32 0.0, %v1389
        %v1391 = vpop.f32.mrb[0].mxu0
        %v1392 = vpop.f32.mrb[0].mxu0
        %v1393 = vadd.f32 0.0, %v1392
        %v1394 = vpop.f32.mrb[0].mxu0
        %1395 = vmatprep.mubr.bf16.mxu0 0
        %1396 = vmatmul.mubr.bf16.gmra.mrb[0].mxu0 %v1277
        %v1397 = vpop.f32.mrb[0].mxu0
        %v1398 = vadd.f32 0.0, %v1397
        %v1399 = vpop.f32.mrb[0].mxu0
        %v1400 = vpop.f32.mrb[0].mxu0
        %v1401 = vadd.f32 0.0, %v1400
        %v1402 = vpop.f32.mrb[0].mxu0
        %1403 = vmatprep.mubr.bf16.mxu0 0
        %1404 = vmatmul.mubr.bf16.gmra.mrb[0].mxu0 %v1278
        %v1405 = vpop.f32.mrb[0].mxu0
        %v1406 = vadd.f32 0.0, %v1405
        %v1407 = vpop.f32.mrb[0].mxu0
        %v1408 = vpop.f32.mrb[0].mxu0
        %v1409 = vadd.f32 0.0, %v1408
        %v1410 = vpop.f32.mrb[0].mxu0
        %1411 = vmatprep.mubr.bf16.mxu0 0
        %1412 = vmatmul.mubr.bf16.gmra.mrb[0].mxu0 %v1279
        %v1413 = vpop.f32.mrb[0].mxu0
        %v1414 = vadd.f32 0.0, %v1413
        %v1415 = vpop.f32.mrb[0].mxu0
        %v1416 = vpop.f32.mrb[0].mxu0
        %v1417 = vadd.f32 0.0, %v1416
        %v1418 = vpop.f32.mrb[0].mxu0
        %1419 = vmatprep.mubr.bf16.mxu0 0
        %1420 = vmatmul.mubr.bf16.gmra.mrb[0].mxu0 %v1280
        %v1421 = vpop.f32.mrb[0].mxu0
        %v1422 = vadd.f32 0.0, %v1421
        %v1423 = vpop.f32.mrb[0].mxu0
        %v1424 = vpop.f32.mrb[0].mxu0
        %v1425 = vadd.f32 0.0, %v1424
        %v1426 = vpop.f32.mrb[0].mxu0
        %1427 = vmatprep.mubr.bf16.mxu0 0
        %1428 = vmatmul.mubr.bf16.gmra.mrb[0].mxu0 %v1281
        %v1429 = vpop.f32.mrb[0].mxu0
        %v1430 = vadd.f32 0.0, %v1429
        %v1431 = vpop.f32.mrb[0].mxu0
        %v1432 = vpop.f32.mrb[0].mxu0
        %v1433 = vadd.f32 0.0, %v1432
        %v1434 = vpop.f32.mrb[0].mxu0
        %1435 = vmatprep.mubr.bf16.mxu0 0
        %1436 = vmatmul.mubr.bf16.gmra.mrb[0].mxu0 %v1282
        %v1437 = vpop.f32.mrb[0].mxu0
        %v1438 = vadd.f32 0.0, %v1437
        %v1439 = vpop.f32.mrb[0].mxu0
        %v1440 = vpop.f32.mrb[0].mxu0
        %v1441 = vadd.f32 0.0, %v1440
        %v1442 = vpop.f32.mrb[0].mxu0
        %1443 = vdwg.mxu0
        %v1444 = vpack.c.bf16 %v1385, %v1382
        %v1445 = vpack.c.bf16 %v1393, %v1390
        %v1446 = vpack.c.bf16 %v1401, %v1398
        %v1447 = vpack.c.bf16 %v1409, %v1406
        %v1448 = vpack.c.bf16 %v1417, %v1414
        %v1449 = vpack.c.bf16 %v1425, %v1422
        %v1450 = vpack.c.bf16 %v1433, %v1430
        %v1451 = vpack.c.bf16 %v1441, %v1438
        %v1452 = vld [vmem:[#allocation5] sm:$0xf]
        %v1453 = vld [vmem:[#allocation5 + $0x4] sm:$0xf]
        %v1454 = vld [vmem:[#allocation5 + $0x8] sm:$0xf]
        %v1455 = vld [vmem:[#allocation5 + $0xc] sm:$0xf]
        %v1456 = vld [vmem:[#allocation5 + $0x10] sm:$0xf]
        %v1457 = vld [vmem:[#allocation5 + $0x14] sm:$0xf]
        %v1458 = vld [vmem:[#allocation5 + $0x18] sm:$0xf]
        %v1459 = vld [vmem:[#allocation5 + $0x1c] sm:$0xf]
        %v1460 = vld [vmem:[#allocation5 + $0x20] sm:$0xf]
        %v1461 = vld [vmem:[#allocation5 + $0x24] sm:$0xf]
        %v1462 = vld [vmem:[#allocation5 + $0x28] sm:$0xf]
        %v1463 = vld [vmem:[#allocation5 + $0x2c] sm:$0xf]
        %v1464 = vld [vmem:[#allocation5 + $0x30] sm:$0xf]
        %v1465 = vld [vmem:[#allocation5 + $0x34] sm:$0xf]
        %v1466 = vld [vmem:[#allocation5 + $0x38] sm:$0xf]
        %v1467 = vld [vmem:[#allocation5 + $0x3c] sm:$0xf]
        %v1468 = vld [vmem:[%s4] sm:$0x1]
        %v1470 = vlaneseq
        %v1471 = vshrl.u32 %v1470, 7
        %v1472 = vsub.s32 0, %v1471
        %v1473 = vrot.slane %v1468, %v1472
        %v1491 = vunpack.c.l.b16 %v1452
        %v1492 = vunpack.c.l.b16 %v1453
        %v1493 = vunpack.c.l.b16 %v1454
        %v1494 = vunpack.c.l.b16 %v1455
        %v1495 = vunpack.c.l.b16 %v1456
        %v1496 = vunpack.c.l.b16 %v1457
        %v1497 = vunpack.c.l.b16 %v1458
        %v1498 = vunpack.c.l.b16 %v1459
        %v1499 = vunpack.c.l.b16 %v1460
        %v1500 = vunpack.c.l.b16 %v1461
        %v1501 = vunpack.c.l.b16 %v1462
        %v1502 = vunpack.c.l.b16 %v1463
        %v1503 = vunpack.c.l.b16 %v1464
        %v1504 = vunpack.c.l.b16 %v1465
        %v1505 = vunpack.c.l.b16 %v1466
        %v1506 = vunpack.c.l.b16 %v1467
        %v1507 = vpack.c.b16 %v1492, %v1491
        %v1508 = vpack.c.b16 %v1494, %v1493
        %v1509 = vpack.c.b16 %v1496, %v1495
        %v1510 = vpack.c.b16 %v1498, %v1497
        %v1511 = vpack.c.b16 %v1500, %v1499
        %v1512 = vpack.c.b16 %v1502, %v1501
        %v1513 = vpack.c.b16 %v1504, %v1503
        %v1514 = vpack.c.b16 %v1506, %v1505
        %1523 = vmatprep.subr.bf16.mxu0 0
        %1524 = vmatpush1.bf16.xpose.msra.mxu0 %v1507
        %1525 = vmatprep.subr.bf16.mxu0 0
        %1526 = vmatpush1.bf16.xpose.msra.mxu0 %v1508
        %1527 = vmatprep.subr.bf16.mxu0 0
        %1528 = vmatpush1.bf16.xpose.msra.mxu0 %v1509
        %1529 = vmatprep.subr.bf16.mxu0 0
        %1530 = vmatpush1.bf16.xpose.msra.mxu0 %v1510
        %1531 = vmatprep.subr.bf16.mxu0 0
        %1532 = vmatpush1.bf16.xpose.msra.mxu0 %v1511
        %1533 = vmatprep.subr.bf16.mxu0 0
        %1534 = vmatpush1.bf16.xpose.msra.mxu0 %v1512
        %1535 = vmatprep.subr.bf16.mxu0 0
        %1536 = vmatpush1.bf16.xpose.msra.mxu0 %v1513
        %1537 = vmatprep.subr.bf16.mxu0 0
        %1538 = vmatpush1.bf16.xpose.msra.mxu0 %v1514
        %1539 = vmatprep.subr.bf16.mxu0 0
        %1540 = vmatpush1.bf16.xpose.msra.mxu0 0
        %1541 = vmatprep.subr.bf16.mxu0 0
        %1542 = vmatpush1.bf16.xpose.msra.mxu0 0
        %1543 = vmatprep.subr.bf16.mxu0 0
        %1544 = vmatpush1.bf16.xpose.msra.mxu0 0
        %1545 = vmatprep.subr.bf16.mxu0 0
        %1546 = vmatpush1.bf16.xpose.msra.mxu0 0
        %1547 = vmatprep.subr.bf16.mxu0 0
        %1548 = vmatpush1.bf16.xpose.msra.mxu0 0
        %1549 = vmatprep.subr.bf16.mxu0 0
        %1550 = vmatpush1.bf16.xpose.msra.mxu0 0
        %1551 = vmatprep.subr.bf16.mxu0 0
        %1552 = vmatpush1.bf16.xpose.msra.mxu0 0
        %1553 = vmatprep.subr.bf16.mxu0 0
        %1554 = vmatpush1.bf16.xpose.msra.mxu0 0
        %1555 = vmatprep.mubr.bf16.mxu0 0
        %1556 = vmatmul.mubr.bf16.gmra.mrb[0].mxu0 %v1444
        %v1557 = vpop.f32.mrb[0].mxu0
        %v1558 = vadd.f32 %v1473, %v1557
        %v1559 = vpop.f32.mrb[0].mxu0
        %v1560 = vpop.f32.mrb[0].mxu0
        %v1561 = vadd.f32 %v1473, %v1560
        %v1562 = vpop.f32.mrb[0].mxu0
        %1563 = vmatprep.mubr.bf16.mxu0 0
        %1564 = vmatmul.mubr.bf16.gmra.mrb[0].mxu0 %v1445
        %v1565 = vpop.f32.mrb[0].mxu0
        %v1566 = vadd.f32 %v1473, %v1565
        %v1567 = vpop.f32.mrb[0].mxu0
        %v1568 = vpop.f32.mrb[0].mxu0
        %v1569 = vadd.f32 %v1473, %v1568
        %v1570 = vpop.f32.mrb[0].mxu0
        %1571 = vmatprep.mubr.bf16.mxu0 0
        %1572 = vmatmul.mubr.bf16.gmra.mrb[0].mxu0 %v1446
        %v1573 = vpop.f32.mrb[0].mxu0
        %v1574 = vadd.f32 %v1473, %v1573
        %v1575 = vpop.f32.mrb[0].mxu0
        %v1576 = vpop.f32.mrb[0].mxu0
        %v1577 = vadd.f32 %v1473, %v1576
        %v1578 = vpop.f32.mrb[0].mxu0
        %1579 = vmatprep.mubr.bf16.mxu0 0
        %1580 = vmatmul.mubr.bf16.gmra.mrb[0].mxu0 %v1447
        %v1581 = vpop.f32.mrb[0].mxu0
        %v1582 = vadd.f32 %v1473, %v1581
        %v1583 = vpop.f32.mrb[0].mxu0
        %v1584 = vpop.f32.mrb[0].mxu0
        %v1585 = vadd.f32 %v1473, %v1584
        %v1586 = vpop.f32.mrb[0].mxu0
        %1587 = vmatprep.mubr.bf16.mxu0 0
        %1588 = vmatmul.mubr.bf16.gmra.mrb[0].mxu0 %v1448
        %v1589 = vpop.f32.mrb[0].mxu0
        %v1590 = vadd.f32 %v1473, %v1589
        %v1591 = vpop.f32.mrb[0].mxu0
        %v1592 = vpop.f32.mrb[0].mxu0
        %v1593 = vadd.f32 %v1473, %v1592
        %v1594 = vpop.f32.mrb[0].mxu0
        %1595 = vmatprep.mubr.bf16.mxu0 0
        %1596 = vmatmul.mubr.bf16.gmra.mrb[0].mxu0 %v1449
        %v1597 = vpop.f32.mrb[0].mxu0
        %v1598 = vadd.f32 %v1473, %v1597
        %v1599 = vpop.f32.mrb[0].mxu0
        %v1600 = vpop.f32.mrb[0].mxu0
        %v1601 = vadd.f32 %v1473, %v1600
        %v1602 = vpop.f32.mrb[0].mxu0
        %1603 = vmatprep.mubr.bf16.mxu0 0
        %1604 = vmatmul.mubr.bf16.gmra.mrb[0].mxu0 %v1450
        %v1605 = vpop.f32.mrb[0].mxu0
        %v1606 = vadd.f32 %v1473, %v1605
        %v1607 = vpop.f32.mrb[0].mxu0
        %v1608 = vpop.f32.mrb[0].mxu0
        %v1609 = vadd.f32 %v1473, %v1608
        %v1610 = vpop.f32.mrb[0].mxu0
        %1611 = vmatprep.mubr.bf16.mxu0 0
        %1612 = vmatmul.mubr.bf16.gmra.mrb[0].mxu0 %v1451
        %v1613 = vpop.f32.mrb[0].mxu0
        %v1614 = vadd.f32 %v1473, %v1613
        %v1615 = vpop.f32.mrb[0].mxu0
        %v1616 = vpop.f32.mrb[0].mxu0
        %v1617 = vadd.f32 %v1473, %v1616
        %v1618 = vpop.f32.mrb[0].mxu0
        %1619 = vdwg.mxu0
        %v1620 = vmax.f32 %v1558, 0.0
        %v1621 = vmax.f32 %v1561, 0.0
        %v1622 = vmax.f32 %v1566, 0.0
        %v1623 = vmax.f32 %v1569, 0.0
        %v1624 = vmax.f32 %v1574, 0.0
        %v1625 = vmax.f32 %v1577, 0.0
        %v1626 = vmax.f32 %v1582, 0.0
        %v1627 = vmax.f32 %v1585, 0.0
        %v1628 = vmax.f32 %v1590, 0.0
        %v1629 = vmax.f32 %v1593, 0.0
        %v1630 = vmax.f32 %v1598, 0.0
        %v1631 = vmax.f32 %v1601, 0.0
        %v1632 = vmax.f32 %v1606, 0.0
        %v1633 = vmax.f32 %v1609, 0.0
        %v1634 = vmax.f32 %v1614, 0.0
        %v1635 = vmax.f32 %v1617, 0.0
        %v1636 = vpack.c.bf16 %v1621, %v1620
        %v1637 = vpack.c.bf16 %v1623, %v1622
        %v1638 = vpack.c.bf16 %v1625, %v1624
        %v1639 = vpack.c.bf16 %v1627, %v1626
        %v1640 = vpack.c.bf16 %v1629, %v1628
        %v1641 = vpack.c.bf16 %v1631, %v1630
        %v1642 = vpack.c.bf16 %v1633, %v1632
        %v1643 = vpack.c.bf16 %v1635, %v1634
        %v1644 = vld [vmem:[%s5] sm:$0xf]
        %v1645 = vld [vmem:[%s5 + $0x4] sm:$0xf]
        %v1646 = vld [vmem:[%s5 + $0x8] sm:$0xf]
        %v1647 = vld [vmem:[%s5 + $0xc] sm:$0xf]
        %v1648 = vld [vmem:[%s5 + $0x10] sm:$0xf]
        %v1649 = vld [vmem:[%s5 + $0x14] sm:$0xf]
        %v1650 = vld [vmem:[%s5 + $0x18] sm:$0xf]
        %v1651 = vld [vmem:[%s5 + $0x1c] sm:$0xf]
        %v1652 = vld [vmem:[%s5 + $0x20] sm:$0xf]
        %v1653 = vld [vmem:[%s5 + $0x24] sm:$0xf]
        %v1654 = vld [vmem:[%s5 + $0x28] sm:$0xf]
        %v1655 = vld [vmem:[%s5 + $0x2c] sm:$0xf]
        %v1656 = vld [vmem:[%s5 + $0x30] sm:$0xf]
        %v1657 = vld [vmem:[%s5 + $0x34] sm:$0xf]
        %v1658 = vld [vmem:[%s5 + $0x38] sm:$0xf]
        %v1659 = vld [vmem:[%s5 + $0x3c] sm:$0xf]
        %v1660 = vld [vmem:[%s5 + $0x40] sm:$0xf]
        %v1661 = vld [vmem:[%s5 + $0x44] sm:$0xf]
        %v1662 = vld [vmem:[%s5 + $0x48] sm:$0xf]
        %v1663 = vld [vmem:[%s5 + $0x4c] sm:$0xf]
        %v1664 = vld [vmem:[%s5 + $0x50] sm:$0xf]
        %v1665 = vld [vmem:[%s5 + $0x54] sm:$0xf]
        %v1666 = vld [vmem:[%s5 + $0x58] sm:$0xf]
        %v1667 = vld [vmem:[%s5 + $0x5c] sm:$0xf]
        %v1668 = vld [vmem:[%s5 + $0x60] sm:$0xf]
        %v1669 = vld [vmem:[%s5 + $0x64] sm:$0xf]
        %v1670 = vld [vmem:[%s5 + $0x68] sm:$0xf]
        %v1671 = vld [vmem:[%s5 + $0x6c] sm:$0xf]
        %v1672 = vld [vmem:[%s5 + $0x70] sm:$0xf]
        %v1673 = vld [vmem:[%s5 + $0x74] sm:$0xf]
        %v1674 = vld [vmem:[%s5 + $0x78] sm:$0xf]
        %v1675 = vld [vmem:[%s5 + $0x7c] sm:$0xf]
        %v1676 = vld [vmem:[%s6] sm:$0x3]
        %v1678 = vlaneseq
        %v1679 = vshrl.u32 %v1678, 7
        %v1680 = vsub.s32 0, %v1679
        %v1681 = vrot.slane %v1676, %v1680
        %v1682 = vlaneseq
        %v1683 = vshrl.u32 %v1682, 7
        %v1684 = vsub.s32 1, %v1683
        %v1685 = vrot.slane %v1676, %v1684
        %v1720 = vunpack.c.l.b16 %v1644
        %v1721 = vunpack.c.l.b16 %v1645
        %v1722 = vunpack.c.l.b16 %v1646
        %v1723 = vunpack.c.l.b16 %v1647
        %v1724 = vunpack.c.l.b16 %v1648
        %v1725 = vunpack.c.l.b16 %v1649
        %v1726 = vunpack.c.l.b16 %v1650
        %v1727 = vunpack.c.l.b16 %v1651
        %v1728 = vunpack.c.l.b16 %v1652
        %v1729 = vunpack.c.l.b16 %v1653
        %v1730 = vunpack.c.l.b16 %v1654
        %v1731 = vunpack.c.l.b16 %v1655
        %v1732 = vunpack.c.l.b16 %v1656
        %v1733 = vunpack.c.l.b16 %v1657
        %v1734 = vunpack.c.l.b16 %v1658
        %v1735 = vunpack.c.l.b16 %v1659
        %v1736 = vunpack.c.l.b16 %v1660
        %v1737 = vunpack.c.l.b16 %v1661
        %v1738 = vunpack.c.l.b16 %v1662
        %v1739 = vunpack.c.l.b16 %v1663
        %v1740 = vunpack.c.l.b16 %v1664
        %v1741 = vunpack.c.l.b16 %v1665
        %v1742 = vunpack.c.l.b16 %v1666
        %v1743 = vunpack.c.l.b16 %v1667
        %v1744 = vunpack.c.l.b16 %v1668
        %v1745 = vunpack.c.l.b16 %v1669
        %v1746 = vunpack.c.l.b16 %v1670
        %v1747 = vunpack.c.l.b16 %v1671
        %v1748 = vunpack.c.l.b16 %v1672
        %v1749 = vunpack.c.l.b16 %v1673
        %v1750 = vunpack.c.l.b16 %v1674
        %v1751 = vunpack.c.l.b16 %v1675
        %v1752 = vpack.c.b16 %v1721, %v1720
        %v1753 = vpack.c.b16 %v1723, %v1722
        %v1754 = vpack.c.b16 %v1725, %v1724
        %v1755 = vpack.c.b16 %v1727, %v1726
        %v1756 = vpack.c.b16 %v1729, %v1728
        %v1757 = vpack.c.b16 %v1731, %v1730
        %v1758 = vpack.c.b16 %v1733, %v1732
        %v1759 = vpack.c.b16 %v1735, %v1734
        %v1760 = vpack.c.b16 %v1737, %v1736
        %v1761 = vpack.c.b16 %v1739, %v1738
        %v1762 = vpack.c.b16 %v1741, %v1740
        %v1763 = vpack.c.b16 %v1743, %v1742
        %v1764 = vpack.c.b16 %v1745, %v1744
        %v1765 = vpack.c.b16 %v1747, %v1746
        %v1766 = vpack.c.b16 %v1749, %v1748
        %v1767 = vpack.c.b16 %v1751, %v1750
        %1784 = vmatprep.subr.bf16.mxu0 0
        %1785 = vmatpush1.bf16.xpose.msra.mxu0 %v1752
        %1786 = vmatprep.subr.bf16.mxu0 0
        %1787 = vmatpush1.bf16.xpose.msra.mxu0 %v1753
        %1788 = vmatprep.subr.bf16.mxu0 0
        %1789 = vmatpush1.bf16.xpose.msra.mxu0 %v1754
        %1790 = vmatprep.subr.bf16.mxu0 0
        %1791 = vmatpush1.bf16.xpose.msra.mxu0 %v1755
        %1792 = vmatprep.subr.bf16.mxu0 0
        %1793 = vmatpush1.bf16.xpose.msra.mxu0 %v1756
        %1794 = vmatprep.subr.bf16.mxu0 0
        %1795 = vmatpush1.bf16.xpose.msra.mxu0 %v1757
        %1796 = vmatprep.subr.bf16.mxu0 0
        %1797 = vmatpush1.bf16.xpose.msra.mxu0 %v1758
        %1798 = vmatprep.subr.bf16.mxu0 0
        %1799 = vmatpush1.bf16.xpose.msra.mxu0 %v1759
        %1800 = vmatprep.subr.bf16.mxu0 0
        %1801 = vmatpush1.bf16.xpose.msra.mxu0 %v1760
        %1802 = vmatprep.subr.bf16.mxu0 0
        %1803 = vmatpush1.bf16.xpose.msra.mxu0 %v1761
        %1804 = vmatprep.subr.bf16.mxu0 0
        %1805 = vmatpush1.bf16.xpose.msra.mxu0 %v1762
        %1806 = vmatprep.subr.bf16.mxu0 0
        %1807 = vmatpush1.bf16.xpose.msra.mxu0 %v1763
        %1808 = vmatprep.subr.bf16.mxu0 0
        %1809 = vmatpush1.bf16.xpose.msra.mxu0 %v1764
        %1810 = vmatprep.subr.bf16.mxu0 0
        %1811 = vmatpush1.bf16.xpose.msra.mxu0 %v1765
        %1812 = vmatprep.subr.bf16.mxu0 0
        %1813 = vmatpush1.bf16.xpose.msra.mxu0 %v1766
        %1814 = vmatprep.subr.bf16.mxu0 0
        %1815 = vmatpush1.bf16.xpose.msra.mxu0 %v1767
        %1816 = vmatprep.mubr.bf16.mxu0 0
        %1817 = vmatmul.mubr.bf16.gmra.mrb[0].mxu0 %v1636
        %v1818 = vpop.f32.mrb[0].mxu0
        %v1819 = vadd.f32 %v1681, %v1818
        %v1820 = vpop.f32.mrb[0].mxu0
        %v1821 = vadd.f32 %v1685, %v1820
        %v1822 = vpop.f32.mrb[0].mxu0
        %v1823 = vadd.f32 %v1681, %v1822
        %v1824 = vpop.f32.mrb[0].mxu0
        %v1825 = vadd.f32 %v1685, %v1824
        %1826 = vmatprep.mubr.bf16.mxu0 0
        %1827 = vmatmul.mubr.bf16.gmra.mrb[0].mxu0 %v1637
        %v1828 = vpop.f32.mrb[0].mxu0
        %v1829 = vadd.f32 %v1681, %v1828
        %v1830 = vpop.f32.mrb[0].mxu0
        %v1831 = vadd.f32 %v1685, %v1830
        %v1832 = vpop.f32.mrb[0].mxu0
        %v1833 = vadd.f32 %v1681, %v1832
        %v1834 = vpop.f32.mrb[0].mxu0
        %v1835 = vadd.f32 %v1685, %v1834
        %1836 = vmatprep.mubr.bf16.mxu0 0
        %1837 = vmatmul.mubr.bf16.gmra.mrb[0].mxu0 %v1638
        %v1838 = vpop.f32.mrb[0].mxu0
        %v1839 = vadd.f32 %v1681, %v1838
        %v1840 = vpop.f32.mrb[0].mxu0
        %v1841 = vadd.f32 %v1685, %v1840
        %v1842 = vpop.f32.mrb[0].mxu0
        %v1843 = vadd.f32 %v1681, %v1842
        %v1844 = vpop.f32.mrb[0].mxu0
        %v1845 = vadd.f32 %v1685, %v1844
        %1846 = vmatprep.mubr.bf16.mxu0 0
        %1847 = vmatmul.mubr.bf16.gmra.mrb[0].mxu0 %v1639
        %v1848 = vpop.f32.mrb[0].mxu0
        %v1849 = vadd.f32 %v1681, %v1848
        %v1850 = vpop.f32.mrb[0].mxu0
        %v1851 = vadd.f32 %v1685, %v1850
        %v1852 = vpop.f32.mrb[0].mxu0
        %v1853 = vadd.f32 %v1681, %v1852
        %v1854 = vpop.f32.mrb[0].mxu0
        %v1855 = vadd.f32 %v1685, %v1854
        %1856 = vmatprep.mubr.bf16.mxu0 0
        %1857 = vmatmul.mubr.bf16.gmra.mrb[0].mxu0 %v1640
        %v1858 = vpop.f32.mrb[0].mxu0
        %v1859 = vadd.f32 %v1681, %v1858
        %v1860 = vpop.f32.mrb[0].mxu0
        %v1861 = vadd.f32 %v1685, %v1860
        %v1862 = vpop.f32.mrb[0].mxu0
        %v1863 = vadd.f32 %v1681, %v1862
        %v1864 = vpop.f32.mrb[0].mxu0
        %v1865 = vadd.f32 %v1685, %v1864
        %1866 = vmatprep.mubr.bf16.mxu0 0
        %1867 = vmatmul.mubr.bf16.gmra.mrb[0].mxu0 %v1641
        %v1868 = vpop.f32.mrb[0].mxu0
        %v1869 = vadd.f32 %v1681, %v1868
        %v1870 = vpop.f32.mrb[0].mxu0
        %v1871 = vadd.f32 %v1685, %v1870
        %v1872 = vpop.f32.mrb[0].mxu0
        %v1873 = vadd.f32 %v1681, %v1872
        %v1874 = vpop.f32.mrb[0].mxu0
        %v1875 = vadd.f32 %v1685, %v1874
        %1876 = vmatprep.mubr.bf16.mxu0 0
        %1877 = vmatmul.mubr.bf16.gmra.mrb[0].mxu0 %v1642
        %v1878 = vpop.f32.mrb[0].mxu0
        %v1879 = vadd.f32 %v1681, %v1878
        %v1880 = vpop.f32.mrb[0].mxu0
        %v1881 = vadd.f32 %v1685, %v1880
        %v1882 = vpop.f32.mrb[0].mxu0
        %v1883 = vadd.f32 %v1681, %v1882
        %v1884 = vpop.f32.mrb[0].mxu0
        %v1885 = vadd.f32 %v1685, %v1884
        %1886 = vmatprep.mubr.bf16.mxu0 0
        %1887 = vmatmul.mubr.bf16.gmra.mrb[0].mxu0 %v1643
        %v1888 = vpop.f32.mrb[0].mxu0
        %v1889 = vadd.f32 %v1681, %v1888
        %v1890 = vpop.f32.mrb[0].mxu0
        %v1891 = vadd.f32 %v1685, %v1890
        %v1892 = vpop.f32.mrb[0].mxu0
        %v1893 = vadd.f32 %v1681, %v1892
        %v1894 = vpop.f32.mrb[0].mxu0
        %v1895 = vadd.f32 %v1685, %v1894
        %1896 = vdwg.mxu0
        %v1897 = vmax.f32 %v1819, %v1821
        %1898 = vmax.xlane.f32.xlu0 %v1897
        %v1899 = vpop.xlane.xlu0 %1898
        %v1900 = vmax.f32 %v1823, %v1825
        %1901 = vmax.xlane.f32.xlu0 %v1900
        %v1902 = vpop.xlane.xlu0 %1901
        %v1903 = vmax.f32 %v1829, %v1831
        %1904 = vmax.xlane.f32.xlu0 %v1903
        %v1905 = vpop.xlane.xlu0 %1904
        %v1906 = vmax.f32 %v1833, %v1835
        %1907 = vmax.xlane.f32.xlu0 %v1906
        %v1908 = vpop.xlane.xlu0 %1907
        %v1909 = vmax.f32 %v1839, %v1841
        %1910 = vmax.xlane.f32.xlu0 %v1909
        %v1911 = vpop.xlane.xlu0 %1910
        %v1912 = vmax.f32 %v1843, %v1845
        %1913 = vmax.xlane.f32.xlu0 %v1912
        %v1914 = vpop.xlane.xlu0 %1913
        %v1915 = vmax.f32 %v1849, %v1851
        %1916 = vmax.xlane.f32.xlu0 %v1915
        %v1917 = vpop.xlane.xlu0 %1916
        %v1918 = vmax.f32 %v1853, %v1855
        %1919 = vmax.xlane.f32.xlu0 %v1918
        %v1920 = vpop.xlane.xlu0 %1919
        %v1921 = vmax.f32 %v1859, %v1861
        %1922 = vmax.xlane.f32.xlu0 %v1921
        %v1923 = vpop.xlane.xlu0 %1922
        %v1924 = vmax.f32 %v1863, %v1865
        %1925 = vmax.xlane.f32.xlu0 %v1924
        %v1926 = vpop.xlane.xlu0 %1925
        %v1927 = vmax.f32 %v1869, %v1871
        %1928 = vmax.xlane.f32.xlu0 %v1927
        %v1929 = vpop.xlane.xlu0 %1928
        %v1930 = vmax.f32 %v1873, %v1875
        %1931 = vmax.xlane.f32.xlu0 %v1930
        %v1932 = vpop.xlane.xlu0 %1931
        %v1933 = vmax.f32 %v1879, %v1881
        %1934 = vmax.xlane.f32.xlu0 %v1933
        %v1935 = vpop.xlane.xlu0 %1934
        %v1936 = vmax.f32 %v1883, %v1885
        %1937 = vmax.xlane.f32.xlu0 %v1936
        %v1938 = vpop.xlane.xlu0 %1937
        %v1939 = vmax.f32 %v1889, %v1891
        %1940 = vmax.xlane.f32.xlu0 %v1939
        %v1941 = vpop.xlane.xlu0 %1940
        %v1942 = vmax.f32 %v1893, %v1895
        %1943 = vmax.xlane.f32.xlu0 %v1942
        %v1944 = vpop.xlane.xlu0 %1943
        %v1945 = vsub.f32 %v1819, %v1899
        %v1946 = vsub.f32 %v1821, %v1899
        %v1947 = vsub.f32 %v1823, %v1902
        %v1948 = vsub.f32 %v1825, %v1902
        %v1949 = vsub.f32 %v1829, %v1905
        %v1950 = vsub.f32 %v1831, %v1905
        %v1951 = vsub.f32 %v1833, %v1908
        %v1952 = vsub.f32 %v1835, %v1908
        %v1953 = vsub.f32 %v1839, %v1911
        %v1954 = vsub.f32 %v1841, %v1911
        %v1955 = vsub.f32 %v1843, %v1914
        %v1956 = vsub.f32 %v1845, %v1914
        %v1957 = vsub.f32 %v1849, %v1917
        %v1958 = vsub.f32 %v1851, %v1917
        %v1959 = vsub.f32 %v1853, %v1920
        %v1960 = vsub.f32 %v1855, %v1920
        %v1961 = vsub.f32 %v1859, %v1923
        %v1962 = vsub.f32 %v1861, %v1923
        %v1963 = vsub.f32 %v1863, %v1926
        %v1964 = vsub.f32 %v1865, %v1926
        %v1965 = vsub.f32 %v1869, %v1929
        %v1966 = vsub.f32 %v1871, %v1929
        %v1967 = vsub.f32 %v1873, %v1932
        %v1968 = vsub.f32 %v1875, %v1932
        %v1969 = vsub.f32 %v1879, %v1935
        %v1970 = vsub.f32 %v1881, %v1935
        %v1971 = vsub.f32 %v1883, %v1938
        %v1972 = vsub.f32 %v1885, %v1938
        %v1973 = vsub.f32 %v1889, %v1941
        %v1974 = vsub.f32 %v1891, %v1941
        %v1975 = vsub.f32 %v1893, %v1944
        %v1976 = vsub.f32 %v1895, %v1944
        %v1977 = vmul.f32 %v1945, 1.442695
        %v1978 = vpow.pop %v1977
        %v1979 = vmul.f32 %v1946, 1.442695
        %v1980 = vpow.pop %v1979
        %v1981 = vmul.f32 %v1947, 1.442695
        %v1982 = vpow.pop %v1981
        %v1983 = vmul.f32 %v1948, 1.442695
        %v1984 = vpow.pop %v1983
        %v1985 = vmul.f32 %v1949, 1.442695
        %v1986 = vpow.pop %v1985
        %v1987 = vmul.f32 %v1950, 1.442695
        %v1988 = vpow.pop %v1987
        %v1989 = vmul.f32 %v1951, 1.442695
        %v1990 = vpow.pop %v1989
        %v1991 = vmul.f32 %v1952, 1.442695
        %v1992 = vpow.pop %v1991
        %v1993 = vmul.f32 %v1953, 1.442695
        %v1994 = vpow.pop %v1993
        %v1995 = vmul.f32 %v1954, 1.442695
        %v1996 = vpow.pop %v1995
        %v1997 = vmul.f32 %v1955, 1.442695
        %v1998 = vpow.pop %v1997
        %v1999 = vmul.f32 %v1956, 1.442695
        %v2000 = vpow.pop %v1999
        %v2001 = vmul.f32 %v1957, 1.442695
        %v2002 = vpow.pop %v2001
        %v2003 = vmul.f32 %v1958, 1.442695
        %v2004 = vpow.pop %v2003
        %v2005 = vmul.f32 %v1959, 1.442695
        %v2006 = vpow.pop %v2005
        %v2007 = vmul.f32 %v1960, 1.442695
        %v2008 = vpow.pop %v2007
        %v2009 = vmul.f32 %v1961, 1.442695
        %v2010 = vpow.pop %v2009
        %v2011 = vmul.f32 %v1962, 1.442695
        %v2012 = vpow.pop %v2011
        %v2013 = vmul.f32 %v1963, 1.442695
        %v2014 = vpow.pop %v2013
        %v2015 = vmul.f32 %v1964, 1.442695
        %v2016 = vpow.pop %v2015
        %v2017 = vmul.f32 %v1965, 1.442695
        %v2018 = vpow.pop %v2017
        %v2019 = vmul.f32 %v1966, 1.442695
        %v2020 = vpow.pop %v2019
        %v2021 = vmul.f32 %v1967, 1.442695
        %v2022 = vpow.pop %v2021
        %v2023 = vmul.f32 %v1968, 1.442695
        %v2024 = vpow.pop %v2023
        %v2025 = vmul.f32 %v1969, 1.442695
        %v2026 = vpow.pop %v2025
        %v2027 = vmul.f32 %v1970, 1.442695
        %v2028 = vpow.pop %v2027
        %v2029 = vmul.f32 %v1971, 1.442695
        %v2030 = vpow.pop %v2029
        %v2031 = vmul.f32 %v1972, 1.442695
        %v2032 = vpow.pop %v2031
        %v2033 = vmul.f32 %v1973, 1.442695
        %v2034 = vpow.pop %v2033
        %v2035 = vmul.f32 %v1974, 1.442695
        %v2036 = vpow.pop %v2035
        %v2037 = vmul.f32 %v1975, 1.442695
        %v2038 = vpow.pop %v2037
        %v2039 = vmul.f32 %v1976, 1.442695
        %v2040 = vpow.pop %v2039
        %v2041 = vadd.f32 %v1978, %v1980
        %2042 = vadd.xlane.f32.xlu0 %v2041
        %v2043 = vpop.xlane.xlu0 %2042
        %v2044 = vadd.f32 %v1982, %v1984
        %2045 = vadd.xlane.f32.xlu0 %v2044
        %v2046 = vpop.xlane.xlu0 %2045
        %v2047 = vadd.f32 %v1986, %v1988
        %2048 = vadd.xlane.f32.xlu0 %v2047
        %v2049 = vpop.xlane.xlu0 %2048
        %v2050 = vadd.f32 %v1990, %v1992
        %2051 = vadd.xlane.f32.xlu0 %v2050
        %v2052 = vpop.xlane.xlu0 %2051
        %v2053 = vadd.f32 %v1994, %v1996
        %2054 = vadd.xlane.f32.xlu0 %v2053
        %v2055 = vpop.xlane.xlu0 %2054
        %v2056 = vadd.f32 %v1998, %v2000
        %2057 = vadd.xlane.f32.xlu0 %v2056
        %v2058 = vpop.xlane.xlu0 %2057
        %v2059 = vadd.f32 %v2002, %v2004
        %2060 = vadd.xlane.f32.xlu0 %v2059
        %v2061 = vpop.xlane.xlu0 %2060
        %v2062 = vadd.f32 %v2006, %v2008
        %2063 = vadd.xlane.f32.xlu0 %v2062
        %v2064 = vpop.xlane.xlu0 %2063
        %v2065 = vadd.f32 %v2010, %v2012
        %2066 = vadd.xlane.f32.xlu0 %v2065
        %v2067 = vpop.xlane.xlu0 %2066
        %v2068 = vadd.f32 %v2014, %v2016
        %2069 = vadd.xlane.f32.xlu0 %v2068
        %v2070 = vpop.xlane.xlu0 %2069
        %v2071 = vadd.f32 %v2018, %v2020
        %2072 = vadd.xlane.f32.xlu0 %v2071
        %v2073 = vpop.xlane.xlu0 %2072
        %v2074 = vadd.f32 %v2022, %v2024
        %2075 = vadd.xlane.f32.xlu0 %v2074
        %v2076 = vpop.xlane.xlu0 %2075
        %v2077 = vadd.f32 %v2026, %v2028
        %2078 = vadd.xlane.f32.xlu0 %v2077
        %v2079 = vpop.xlane.xlu0 %2078
        %v2080 = vadd.f32 %v2030, %v2032
        %2081 = vadd.xlane.f32.xlu0 %v2080
        %v2082 = vpop.xlane.xlu0 %2081
        %v2083 = vadd.f32 %v2034, %v2036
        %2084 = vadd.xlane.f32.xlu0 %v2083
        %v2085 = vpop.xlane.xlu0 %2084
        %v2086 = vadd.f32 %v2038, %v2040
        %2087 = vadd.xlane.f32.xlu0 %v2086
        %v2088 = vpop.xlane.xlu0 %2087
        %v2089 = vlog2.pop %v2043
        %v2090 = vmul.f32 %v2089, 0.6931472
        %v2091 = vlog2.pop %v2046
        %v2092 = vmul.f32 %v2091, 0.6931472
        %v2093 = vlog2.pop %v2049
        %v2094 = vmul.f32 %v2093, 0.6931472
        %v2095 = vlog2.pop %v2052
        %v2096 = vmul.f32 %v2095, 0.6931472
        %v2097 = vlog2.pop %v2055
        %v2098 = vmul.f32 %v2097, 0.6931472
        %v2099 = vlog2.pop %v2058
        %v2100 = vmul.f32 %v2099, 0.6931472
        %v2101 = vlog2.pop %v2061
        %v2102 = vmul.f32 %v2101, 0.6931472
        %v2103 = vlog2.pop %v2064
        %v2104 = vmul.f32 %v2103, 0.6931472
        %v2105 = vlog2.pop %v2067
        %v2106 = vmul.f32 %v2105, 0.6931472
        %v2107 = vlog2.pop %v2070
        %v2108 = vmul.f32 %v2107, 0.6931472
        %v2109 = vlog2.pop %v2073
        %v2110 = vmul.f32 %v2109, 0.6931472
        %v2111 = vlog2.pop %v2076
        %v2112 = vmul.f32 %v2111, 0.6931472
        %v2113 = vlog2.pop %v2079
        %v2114 = vmul.f32 %v2113, 0.6931472
        %v2115 = vlog2.pop %v2082
        %v2116 = vmul.f32 %v2115, 0.6931472
        %v2117 = vlog2.pop %v2085
        %v2118 = vmul.f32 %v2117, 0.6931472
        %v2119 = vlog2.pop %v2088
        %v2120 = vmul.f32 %v2119, 0.6931472
        %v2121 = vadd.f32 %v1899, %v2090
        %v2122 = vadd.f32 %v1902, %v2092
        %v2123 = vadd.f32 %v1905, %v2094
        %v2124 = vadd.f32 %v1908, %v2096
        %v2125 = vadd.f32 %v1911, %v2098
        %v2126 = vadd.f32 %v1914, %v2100
        %v2127 = vadd.f32 %v1917, %v2102
        %v2128 = vadd.f32 %v1920, %v2104
        %v2129 = vadd.f32 %v1923, %v2106
        %v2130 = vadd.f32 %v1926, %v2108
        %v2131 = vadd.f32 %v1929, %v2110
        %v2132 = vadd.f32 %v1932, %v2112
        %v2133 = vadd.f32 %v1935, %v2114
        %v2134 = vadd.f32 %v1938, %v2116
        %v2135 = vadd.f32 %v1941, %v2118
        %v2136 = vadd.f32 %v1944, %v2120
        %v2137 = vsub.f32 %v1819, %v2121
        %v2138 = vsub.f32 %v1821, %v2121
        %v2139 = vsub.f32 %v1823, %v2122
        %v2140 = vsub.f32 %v1825, %v2122
        %v2141 = vsub.f32 %v1829, %v2123
        %v2142 = vsub.f32 %v1831, %v2123
        %v2143 = vsub.f32 %v1833, %v2124
        %v2144 = vsub.f32 %v1835, %v2124
        %v2145 = vsub.f32 %v1839, %v2125
        %v2146 = vsub.f32 %v1841, %v2125
        %v2147 = vsub.f32 %v1843, %v2126
        %v2148 = vsub.f32 %v1845, %v2126
        %v2149 = vsub.f32 %v1849, %v2127
        %v2150 = vsub.f32 %v1851, %v2127
        %v2151 = vsub.f32 %v1853, %v2128
        %v2152 = vsub.f32 %v1855, %v2128
        %v2153 = vsub.f32 %v1859, %v2129
        %v2154 = vsub.f32 %v1861, %v2129
        %v2155 = vsub.f32 %v1863, %v2130
        %v2156 = vsub.f32 %v1865, %v2130
        %v2157 = vsub.f32 %v1869, %v2131
        %v2158 = vsub.f32 %v1871, %v2131
        %v2159 = vsub.f32 %v1873, %v2132
        %v2160 = vsub.f32 %v1875, %v2132
        %v2161 = vsub.f32 %v1879, %v2133
        %v2162 = vsub.f32 %v1881, %v2133
        %v2163 = vsub.f32 %v1883, %v2134
        %v2164 = vsub.f32 %v1885, %v2134
        %v2165 = vsub.f32 %v1889, %v2135
        %v2166 = vsub.f32 %v1891, %v2135
        %v2167 = vsub.f32 %v1893, %v2136
        %v2168 = vsub.f32 %v1895, %v2136
        %2169 = vst [vmem:[%s302] sm:$0xff] %v2137
        %2170 = vst [vmem:[%s302 + $0x8] sm:$0xff] %v2138
        %2171 = vst [vmem:[%s302 + $0x10] sm:$0xff] %v2139
        %2172 = vst [vmem:[%s302 + $0x18] sm:$0xff] %v2140
        %2173 = vst [vmem:[%s302 + $0x20] sm:$0xff] %v2141
        %2174 = vst [vmem:[%s302 + $0x28] sm:$0xff] %v2142
        %2175 = vst [vmem:[%s302 + $0x30] sm:$0xff] %v2143
        %2176 = vst [vmem:[%s302 + $0x38] sm:$0xff] %v2144
        %2177 = vst [vmem:[%s302 + $0x40] sm:$0xff] %v2145
        %2178 = vst [vmem:[%s302 + $0x48] sm:$0xff] %v2146
        %2179 = vst [vmem:[%s302 + $0x50] sm:$0xff] %v2147
        %2180 = vst [vmem:[%s302 + $0x58] sm:$0xff] %v2148
        %2181 = vst [vmem:[%s302 + $0x60] sm:$0xff] %v2149
        %2182 = vst [vmem:[%s302 + $0x68] sm:$0xff] %v2150
        %2183 = vst [vmem:[%s302 + $0x70] sm:$0xff] %v2151
        %2184 = vst [vmem:[%s302 + $0x78] sm:$0xff] %v2152
        %2185 = vst [vmem:[%s302 + $0x80] sm:$0xff] %v2153
        %2186 = vst [vmem:[%s302 + $0x88] sm:$0xff] %v2154
        %2187 = vst [vmem:[%s302 + $0x90] sm:$0xff] %v2155
        %2188 = vst [vmem:[%s302 + $0x98] sm:$0xff] %v2156
        %2189 = vst [vmem:[%s302 + $0xa0] sm:$0xff] %v2157
        %2190 = vst [vmem:[%s302 + $0xa8] sm:$0xff] %v2158
        %2191 = vst [vmem:[%s302 + $0xb0] sm:$0xff] %v2159
        %2192 = vst [vmem:[%s302 + $0xb8] sm:$0xff] %v2160
        %2193 = vst [vmem:[%s302 + $0xc0] sm:$0xff] %v2161
        %2194 = vst [vmem:[%s302 + $0xc8] sm:$0xff] %v2162
        %2195 = vst [vmem:[%s302 + $0xd0] sm:$0xff] %v2163
        %2196 = vst [vmem:[%s302 + $0xd8] sm:$0xff] %v2164
        %2197 = vst [vmem:[%s302 + $0xe0] sm:$0xff] %v2165
        %2198 = vst [vmem:[%s302 + $0xe8] sm:$0xff] %v2166
        %2199 = vst [vmem:[%s302 + $0xf0] sm:$0xff] %v2167
        %2200 = vst [vmem:[%s302 + $0xf8] sm:$0xff] %v2168
        %s2201 = sand.u32 %s183, 1
        %s2202 = scalar_lea.sflag [#allocation4], %s2201
        %s2203 = sand.u32 %s183, 1
        %s2204 = smul.addr %s2203, 256
        %s2205 = scalar_lea.vmem [#allocation7], %s2204
        // Predicated region
        $region57: #{tpu_custom_call.1} parent=47 // pred_check
          %p2206 = pneg %p193
        $region58: #{tpu_custom_call.1} parent=47 // pred_check_branch
          %2208 = sbr.rel (%p2206) target = $region60
        $region59: #{tpu_custom_call.1} parent=47 // pred_region
          %s2209 = smul.u32 16, %s23
          %s2211 = ssub.s32 4096, 4096
          %2212 = vsyncadd %s2202, %s2211
          %s2213 = smul.addr %s2209, 2
          %s2214 = smul.addr %s2213, 128
          %s2215 = scalar_lea.hbm %s7, %s2214
          %s2216 = sshll.u32 %s2205, 4
          %s2217 = int_to_ptr.vmem [resolvable:$true] %s2216
          %2222 = dma.vmem_to_hbm [thread:$0]  %s2217, 4096, %s2215, %s2202, 256, 256, 16
        $region60: #{tpu_custom_call.1} parent=47 // pred_fallthru
          _
      $region48: #{tpu_custom_call.1} parent=5 // pred_fallthru
        _
      %p2223 = scmp.le.s32.totalorder 2, %s18
      // Predicated region
      $region61: #{tpu_custom_call.1} parent=5 // pred_check
        %p2224 = pneg %p2223
      $region62: #{tpu_custom_call.1} parent=5 // pred_check_branch
        %2226 = sbr.rel (%p2224) target = $region64
      $region63: #{tpu_custom_call.1} parent=5 // pred_region
        %s2227 = ssub.s32 %s18, 2
        // Predicated region
        $region65: #{tpu_custom_call.1} parent=63 // pred_check
          %p2228 = pneg %p199
        $region66: #{tpu_custom_call.1} parent=63 // pred_check_branch
          %2230 = sbr.rel (%p2228) target = $region68
        $region67: #{tpu_custom_call.1} parent=63 // pred_region
          %s2231 = sand.u32 %s184, 1
          %s2232 = scalar_lea.sflag [#allocation4], %s2231
          %s2233 = sand.u32 %s184, 1
          %s2234 = smul.addr %s2233, 256
          %s2235 = scalar_lea.vmem [#allocation7], %s2234
          %2236 = dma.done %s2232, 4096
        $region68: #{tpu_custom_call.1} parent=63 // pred_fallthru
          _
      $region64: #{tpu_custom_call.1} parent=5 // pred_fallthru
        _
    $region6: #{tpu_custom_call.1} parent=1 // loop_footer
      %s22 = sadd.s32 1, %s18
    $region7: #{tpu_custom_call.1} parent=1 // loop_footer_branch
      %17 = sbr.rel target = $region3
    $region8: #{tpu_custom_call.1} parent=1 // loop_exit
      _
    %2237 = vsyncpa [#allocation3], 1
    %s2238 = scalar_lea.sflag [#allocation3], 1
    %2239 = vsyncpa %s2238, 1
    %2240 = vsyncpa [#allocation6], 1
    %2241 = vsyncpa [#allocation4], 1
    %s2242 = scalar_lea.sflag [#allocation4], 1
    %2243 = vsyncpa %s2242, 1

</llo_original>
